<compile_context>
chip_gen: v7x
topology: tpu7x:2x2x1
jax: 0.10.0
libtpu: 0.0.40
codegen_flags: <defaults>
</compile_context>

<pallas_src>
import jax
import jax.numpy as jnp
from jax.experimental import pallas as pl
from jax.experimental.pallas import tpu as pltpu

INPUT_SIZE = 44
HIDDEN = 64


def _lstm_kernel(x_ref, h0_ref, c0_ref, wx_ref, wh_ref, b_ref, wo_ref, bo_ref,
                 out_ref, hn_ref, cn_ref, xw_scr, hs_scr):
    # x_ref  : (T*B, F)  time-major input rows (row t*B + b = x[b, t, :])
    # h0/c0  : (1, B, H) initial recurrent state (indexed in-kernel)
    # wx_ref : (F, 4H)   fused input weights  (gate order i|f|g|o, g cols pre-scaled x2)
    # wh_ref : (H, 4H)   fused recurrent weights (g cols pre-scaled x2)
    # b_ref  : (1, 4H)   b_ih + b_hh (g slice pre-scaled x2)
    # wo_ref : (1, H)    output-head weight row
    # bo_ref : (1, 1)    output-head bias (SMEM scalar)
    # out    : (B, T)    sigmoid(Linear(h_t)) — T on the lane axis (lane-dense store)
    # hn/cn  : (1, B, H) final state
    # xw_scr : (T*B, 4H) VMEM scratch for the precomputed input projection
    # hs_scr : (T, B, H) VMEM scratch holding every h_t for the batched output head
    T, B, H = hs_scr.shape

    # ---- Input projection for ALL timesteps: one MXU matmul, biases folded in.
    # Lives entirely in VMEM (no HBM round-trip, no separate XLA dispatch).
    xw_scr[...] = (jnp.dot(x_ref[...], wx_ref[...],
                           preferred_element_type=jnp.float32) + b_ref[...])

    wh = wh_ref[...]                                   # hoisted, loop-invariant

    def step(t, carry):
        h_prev, c_prev = carry                         # (B, H) each
        # One fused (B,H)@(H,4H) MXU matmul per step + precomputed projection row.
        gates = (jnp.dot(h_prev, wh, preferred_element_type=jnp.float32)
                 + xw_scr[pl.ds(t * B, B), :])         # (B, 4H)
        # Single full-width sigmoid (1 EUP launch). The g gate's tanh is recovered
        # exactly because its weight/bias columns were pre-scaled by 2:
        #   tanh(z) = 2*sigmoid(2z) - 1.
        s = jax.nn.sigmoid(gates)
        i_g = s[:, 0 * H:1 * H]
        f_g = s[:, 1 * H:2 * H]
        g_g = 2.0 * s[:, 2 * H:3 * H] - 1.0
        o_g = s[:, 3 * H:4 * H]
        c_new = f_g * c_prev + i_g * g_g
        h_new = o_g * jnp.tanh(c_new)                  # 2nd (and last) EUP launch
        hs_scr[t] = h_new                              # stash for the batched head
        return (h_new, c_new)

    h_fin, c_fin = jax.lax.fori_loop(
        0, T, step, (h0_ref[0], c0_ref[0]), unroll=min(T, 8))

    hn_ref[0] = h_fin
    cn_ref[0] = c_fin

    # ---- Output head for all timesteps at once: Linear(64->1)+Sigmoid as a VPU
    # multiply + lane reduction (no T tiny N=1 matmuls), emitted lane-dense as (B,T).
    hs = hs_scr[...]                                           # (T, B, H)
    z = jnp.sum(hs * wo_ref[...], axis=-1) + bo_ref[0, 0]      # (T, B)
    out_ref[...] = jnp.transpose(jax.nn.sigmoid(z))            # (B, T), single store


def _padded_f32_bytes(*shapes):
    """Rough VMEM footprint of f32 arrays with (8,128) tile padding."""
    total = 0
    for s in shapes:
        s = tuple(s)
        if len(s) < 2:
            s = (1,) + (s if s else (1,))
        lead = 1
        for d in s[:-2]:
            lead *= d
        total += lead * (-(-s[-2] // 8) * 8) * (-(-s[-1] // 128) * 128) * 4
    return total


def mylstm_forward(x_btf, h0, c0, fused_params):
    """x_btf: [B, T, F] (batch_first). h0/c0: [1, B, H].
    Returns (out [B, T, 1], (h_n [1, B, H], c_n [1, B, H]))."""
    wx_f, wh_f, b_f, wo, bo = fused_params
    B, T, F = x_btf.shape
    H = wh_f.shape[0]

    # Single small layout op (one fused XLA copy): time-major 2-D view of x so every
    # in-kernel access is a contiguous leading-dim slice.  All heavy intermediates
    # (the x@Wx projection and the per-step hidden states) stay in VMEM.
    x_2d = jnp.transpose(x_btf, (1, 0, 2)).reshape(T * B, F)

    est = _padded_f32_bytes(
        (T * B, F), (1, B, H), (1, B, H), (F, 4 * H), (H, 4 * H), (1, 4 * H),
        (1, H), (B, T), (1, B, H), (1, B, H), (T * B, 4 * H), (T, B, H))
    vmem_limit = max(32 * 1024 * 1024, min(2 * est + (2 << 20), 100 * 1024 * 1024))

    vmem = pl.BlockSpec(memory_space=pltpu.MemorySpace.VMEM)
    smem = pl.BlockSpec(memory_space=pltpu.MemorySpace.SMEM)

    out_bt, hn, cn = pl.pallas_call(
        _lstm_kernel,
        out_shape=(
            jax.ShapeDtypeStruct((B, T), jnp.float32),
            jax.ShapeDtypeStruct((1, B, H), jnp.float32),
            jax.ShapeDtypeStruct((1, B, H), jnp.float32),
        ),
        in_specs=[vmem, vmem, vmem, vmem, vmem, vmem, vmem, smem],
        out_specs=(vmem, vmem, vmem),
        scratch_shapes=[
            pltpu.VMEM((T * B, 4 * H), jnp.float32),   # xw projection
            pltpu.VMEM((T, B, H), jnp.float32),        # all hidden states
        ],
        compiler_params=pltpu.CompilerParams(vmem_limit_bytes=vmem_limit),
    )(x_2d, h0, c0, wx_f, wh_f, b_f, wo, bo)

    out = out_bt[..., None]          # (B, T, 1) — metadata reshape, no HBM copy
    return out, (hn, cn)


def init_torch_params(key, input_size=INPUT_SIZE, hidden=HIDDEN):
    """Raw nn.LSTM / nn.Linear shaped parameters (PyTorch gate order i|f|g|o)."""
    k = jax.random.split(key, 6)
    s = 1.0 / jnp.sqrt(hidden)
    w_ih = jax.random.uniform(k[0], (4 * hidden, input_size), jnp.float32, -s, s)
    w_hh = jax.random.uniform(k[1], (4 * hidden, hidden), jnp.float32, -s, s)
    b_ih = jax.random.uniform(k[2], (4 * hidden,), jnp.float32, -s, s)
    b_hh = jax.random.uniform(k[3], (4 * hidden,), jnp.float32, -s, s)
    w_out = jax.random.uniform(k[4], (1, hidden), jnp.float32, -s, s)
    b_out = jax.random.uniform(k[5], (1,), jnp.float32, -s, s)
    return w_ih, w_hh, b_ih, b_hh, w_out, b_out


def fuse_params(torch_params):
    """Fold PyTorch params into the kernel layout:
      * transpose to right-multiplication form, fuse the 4 gates along one 4H axis,
      * fold b_ih + b_hh into one bias,
      * pre-scale the g-gate columns by 2 so tanh(z) == 2*sigmoid(2z) - 1 lets the
        kernel use a single full-width sigmoid per step (exact rewrite)."""
    w_ih, w_hh, b_ih, b_hh, w_out, b_out = torch_params
    H = w_hh.shape[1]
    scale = jnp.concatenate(
        [jnp.ones((2 * H,), jnp.float32),
         2.0 * jnp.ones((H,), jnp.float32),
         jnp.ones((H,), jnp.float32)])
    wx_f = w_ih.T * scale                       # (F, 4H)
    wh_f = w_hh.T * scale                       # (H, 4H)
    b_f = ((b_ih + b_hh) * scale).reshape(1, 4 * H)
    wo = w_out                                  # (1, H)
    bo = b_out.reshape(1, 1)                    # (1, 1) SMEM scalar
    return wx_f, wh_f, b_f, wo, bo


def reference_forward(x_btf, h0, c0, torch_params):
    """Pure-JAX reference using the RAW PyTorch-style parameters (validates both the
    parameter fusion and the tanh->sigmoid rewrite)."""
    w_ih, w_hh, b_ih, b_hh, w_out, b_out = torch_params
    H = w_hh.shape[1]

    def step(carry, x_t):
        h, c = carry
        gates = x_t @ w_ih.T + h @ w_hh.T + b_ih + b_hh
        i = jax.nn.sigmoid(gates[:, 0 * H:1 * H])
        f = jax.nn.sigmoid(gates[:, 1 * H:2 * H])
        g = jnp.tanh(gates[:, 2 * H:3 * H])
        o = jax.nn.sigmoid(gates[:, 3 * H:4 * H])
        c_new = f * c + i * g
        h_new = o * jnp.tanh(c_new)
        y = jax.nn.sigmoid(h_new @ w_out.T + b_out)      # (B, 1)
        return (h_new, c_new), y

    (h_n, c_n), ys = jax.lax.scan(step, (h0[0], c0[0]),
                                  jnp.transpose(x_btf, (1, 0, 2)))
    return jnp.transpose(ys, (1, 0, 2)), (h_n[None], c_n[None])


if __name__ == "__main__":
    B, T, F, H = 2, 8, INPUT_SIZE, HIDDEN
    key = jax.random.PRNGKey(0)
    kx, kh, kc, kp = jax.random.split(key, 4)
    x = jax.random.normal(kx, (B, T, F), jnp.float32)
    h0 = jax.random.normal(kh, (1, B, H), jnp.float32)
    c0 = jax.random.normal(kc, (1, B, H), jnp.float32)

    torch_params = init_torch_params(kp)
    fused_params = fuse_params(torch_params)

    out, (hn, cn) = jax.jit(mylstm_forward)(x, h0, c0, fused_params)
    jax.block_until_ready((out, hn, cn))

    out_ref, (hn_ref, cn_ref) = reference_forward(x, h0, c0, torch_params)
    assert out.shape == (B, T, 1) and hn.shape == (1, B, H) and cn.shape == (1, B, H)
    assert jnp.allclose(out, out_ref, rtol=1e-4, atol=1e-4)
    assert jnp.allclose(hn, hn_ref, rtol=1e-4, atol=1e-4)
    assert jnp.allclose(cn, cn_ref, rtol=1e-4, atol=1e-4)

    print("KERNEL_OK")
</pallas_src>

<mosaic_0001>
module attributes {stable_mosaic.version = 11 : i64} {
  func.func @_lstm_kernel(%arg0: memref<16x44xf32, #tpu.memory_space<vmem>>, %arg1: memref<1x2x64xf32, #tpu.memory_space<vmem>>, %arg2: memref<1x2x64xf32, #tpu.memory_space<vmem>>, %arg3: memref<44x256xf32, #tpu.memory_space<vmem>>, %arg4: memref<64x256xf32, #tpu.memory_space<vmem>>, %arg5: memref<1x256xf32, #tpu.memory_space<vmem>>, %arg6: memref<1x64xf32, #tpu.memory_space<vmem>>, %arg7: memref<1x1xf32, #tpu.memory_space<smem>>, %arg8: memref<2x8xf32, #tpu.memory_space<vmem>>, %arg9: memref<1x2x64xf32, #tpu.memory_space<vmem>>, %arg10: memref<1x2x64xf32, #tpu.memory_space<vmem>>, %arg11: memref<16x256xf32, #tpu.memory_space<vmem>>, %arg12: memref<8x2x64xf32, #tpu.memory_space<vmem>>) attributes {dimension_semantics = [], scalar_prefetch = 0 : i64, scratch_operands = 2 : i64, tpu.core_type = #tpu.core_type<tc>} {
    %c0 = arith.constant 0 : index
    %c0_0 = arith.constant 0 : index
    %0 = vector.load %arg0[%c0, %c0_0] : memref<16x44xf32, #tpu.memory_space<vmem>>, vector<16x44xf32>
    %c0_1 = arith.constant 0 : index
    %c0_2 = arith.constant 0 : index
    %1 = vector.load %arg3[%c0_1, %c0_2] : memref<44x256xf32, #tpu.memory_space<vmem>>, vector<44x256xf32>
    %cst = arith.constant dense<0.000000e+00> : vector<16x256xf32>
    %2 = tpu.matmul %0, %1, %cst {dimension_numbers = #tpu.dot_dimension_numbers<[1], [0], [0], [1], [0, 0, 1, 1], [], []>} : vector<16x44xf32>, vector<44x256xf32>, vector<16x256xf32> -> vector<16x256xf32>
    %c0_3 = arith.constant 0 : index
    %c0_4 = arith.constant 0 : index
    %3 = vector.load %arg5[%c0_3, %c0_4] : memref<1x256xf32, #tpu.memory_space<vmem>>, vector<1x256xf32>
    %4 = vector.broadcast %3 : vector<1x256xf32> to vector<16x256xf32>
    %5 = arith.addf %2, %4 : vector<16x256xf32>
    %c0_5 = arith.constant 0 : index
    %c0_6 = arith.constant 0 : index
    %6 = vector.load %arg11[%c0_5, %c0_6] : memref<16x256xf32, #tpu.memory_space<vmem>>, vector<16x256xf32>
    tpu.vector_store %arg11[%c0_5, %c0_6], %5 {strides = array<i32>} : memref<16x256xf32, #tpu.memory_space<vmem>>, vector<16x256xf32>,
    %c0_7 = arith.constant 0 : index
    %c0_8 = arith.constant 0 : index
    %7 = vector.load %arg4[%c0_7, %c0_8] : memref<64x256xf32, #tpu.memory_space<vmem>>, vector<64x256xf32>
    %c0_9 = arith.constant 0 : index
    %c0_10 = arith.constant 0 : index
    %c0_11 = arith.constant 0 : index
    %8 = vector.load %arg1[%c0_9, %c0_10, %c0_11] : memref<1x2x64xf32, #tpu.memory_space<vmem>>, vector<1x2x64xf32>
    %9 = vector.shape_cast %8 : vector<1x2x64xf32> to vector<2x64xf32>
    %c0_12 = arith.constant 0 : index
    %c0_13 = arith.constant 0 : index
    %c0_14 = arith.constant 0 : index
    %10 = vector.load %arg2[%c0_12, %c0_13, %c0_14] : memref<1x2x64xf32, #tpu.memory_space<vmem>>, vector<1x2x64xf32>
    %11 = vector.shape_cast %10 : vector<1x2x64xf32> to vector<2x64xf32>
    %c0_i32 = arith.constant 0 : i32
    %cst_15 = arith.constant dense<0.000000e+00> : vector<2x256xf32>
    %12 = tpu.matmul %9, %7, %cst_15 {dimension_numbers = #tpu.dot_dimension_numbers<[1], [0], [0], [1], [0, 0, 1, 1], [], []>} : vector<2x64xf32>, vector<64x256xf32>, vector<2x256xf32> -> vector<2x256xf32>
    %c2_i32 = arith.constant 2 : i32
    %13 = arith.muli %c0_i32, %c2_i32 : i32
    %14 = arith.index_cast %13 : i32 to index
    %c0_16 = arith.constant 0 : index
    %15 = vector.load %arg11[%14, %c0_16] : memref<16x256xf32, #tpu.memory_space<vmem>>, vector<2x256xf32>
    %16 = arith.addf %12, %15 : vector<2x256xf32>
    %17 = arith.negf %16 : vector<2x256xf32>
    %18 = math.exp %17 : vector<2x256xf32>
    %cst_17 = arith.constant 1.000000e+00 : f32
    %19 = vector.broadcast %cst_17 : f32 to vector<2x256xf32>
    %20 = arith.addf %19, %18 : vector<2x256xf32>
    %21 = arith.divf %19, %20 : vector<2x256xf32>
    %22 = vector.extract_strided_slice %21 {offsets = [0, 0], sizes = [2, 64], strides = [1, 1]} : vector<2x256xf32> to vector<2x64xf32>
    %23 = vector.extract_strided_slice %21 {offsets = [0, 64], sizes = [2, 64], strides = [1, 1]} : vector<2x256xf32> to vector<2x64xf32>
    %24 = vector.extract_strided_slice %21 {offsets = [0, 128], sizes = [2, 64], strides = [1, 1]} : vector<2x256xf32> to vector<2x64xf32>
    %cst_18 = arith.constant 2.000000e+00 : f32
    %25 = vector.broadcast %cst_18 : f32 to vector<2x64xf32>
    %26 = arith.mulf %25, %24 : vector<2x64xf32>
    %cst_19 = arith.constant 1.000000e+00 : f32
    %27 = vector.broadcast %cst_19 : f32 to vector<2x64xf32>
    %28 = arith.subf %26, %27 : vector<2x64xf32>
    %29 = vector.extract_strided_slice %21 {offsets = [0, 192], sizes = [2, 64], strides = [1, 1]} : vector<2x256xf32> to vector<2x64xf32>
    %30 = arith.mulf %23, %11 : vector<2x64xf32>
    %31 = arith.mulf %22, %28 : vector<2x64xf32>
    %32 = arith.addf %30, %31 : vector<2x64xf32>
    %33 = math.tanh %32 : vector<2x64xf32>
    %34 = arith.mulf %29, %33 : vector<2x64xf32>
    %35 = arith.index_cast %c0_i32 : i32 to index
    %c0_20 = arith.constant 0 : index
    %c0_21 = arith.constant 0 : index
    %36 = vector.load %arg12[%35, %c0_20, %c0_21] : memref<8x2x64xf32, #tpu.memory_space<vmem>>, vector<1x2x64xf32>
    %37 = vector.shape_cast %36 : vector<1x2x64xf32> to vector<2x64xf32>
    %38 = vector.shape_cast %34 : vector<2x64xf32> to vector<1x2x64xf32>
    tpu.vector_store %arg12[%35, %c0_20, %c0_21], %38 {strides = array<i32>} : memref<8x2x64xf32, #tpu.memory_space<vmem>>, vector<1x2x64xf32>,
    %c1_i32 = arith.constant 1 : i32
    %cst_22 = arith.constant dense<0.000000e+00> : vector<2x256xf32>
    %39 = tpu.matmul %34, %7, %cst_22 {dimension_numbers = #tpu.dot_dimension_numbers<[1], [0], [0], [1], [0, 0, 1, 1], [], []>} : vector<2x64xf32>, vector<64x256xf32>, vector<2x256xf32> -> vector<2x256xf32>
    %c2_i32_23 = arith.constant 2 : i32
    %40 = arith.muli %c1_i32, %c2_i32_23 : i32
    %41 = arith.index_cast %40 : i32 to index
    %c0_24 = arith.constant 0 : index
    %42 = vector.load %arg11[%41, %c0_24] : memref<16x256xf32, #tpu.memory_space<vmem>>, vector<2x256xf32>
    %43 = arith.addf %39, %42 : vector<2x256xf32>
    %44 = arith.negf %43 : vector<2x256xf32>
    %45 = math.exp %44 : vector<2x256xf32>
    %cst_25 = arith.constant 1.000000e+00 : f32
    %46 = vector.broadcast %cst_25 : f32 to vector<2x256xf32>
    %47 = arith.addf %46, %45 : vector<2x256xf32>
    %48 = arith.divf %46, %47 : vector<2x256xf32>
    %49 = vector.extract_strided_slice %48 {offsets = [0, 0], sizes = [2, 64], strides = [1, 1]} : vector<2x256xf32> to vector<2x64xf32>
    %50 = vector.extract_strided_slice %48 {offsets = [0, 64], sizes = [2, 64], strides = [1, 1]} : vector<2x256xf32> to vector<2x64xf32>
    %51 = vector.extract_strided_slice %48 {offsets = [0, 128], sizes = [2, 64], strides = [1, 1]} : vector<2x256xf32> to vector<2x64xf32>
    %cst_26 = arith.constant 2.000000e+00 : f32
    %52 = vector.broadcast %cst_26 : f32 to vector<2x64xf32>
    %53 = arith.mulf %52, %51 : vector<2x64xf32>
    %cst_27 = arith.constant 1.000000e+00 : f32
    %54 = vector.broadcast %cst_27 : f32 to vector<2x64xf32>
    %55 = arith.subf %53, %54 : vector<2x64xf32>
    %56 = vector.extract_strided_slice %48 {offsets = [0, 192], sizes = [2, 64], strides = [1, 1]} : vector<2x256xf32> to vector<2x64xf32>
    %57 = arith.mulf %50, %32 : vector<2x64xf32>
    %58 = arith.mulf %49, %55 : vector<2x64xf32>
    %59 = arith.addf %57, %58 : vector<2x64xf32>
    %60 = math.tanh %59 : vector<2x64xf32>
    %61 = arith.mulf %56, %60 : vector<2x64xf32>
    %62 = arith.index_cast %c1_i32 : i32 to index
    %c0_28 = arith.constant 0 : index
    %c0_29 = arith.constant 0 : index
    %63 = vector.load %arg12[%62, %c0_28, %c0_29] : memref<8x2x64xf32, #tpu.memory_space<vmem>>, vector<1x2x64xf32>
    %64 = vector.shape_cast %63 : vector<1x2x64xf32> to vector<2x64xf32>
    %65 = vector.shape_cast %61 : vector<2x64xf32> to vector<1x2x64xf32>
    tpu.vector_store %arg12[%62, %c0_28, %c0_29], %65 {strides = array<i32>} : memref<8x2x64xf32, #tpu.memory_space<vmem>>, vector<1x2x64xf32>,
    %c2_i32_30 = arith.constant 2 : i32
    %cst_31 = arith.constant dense<0.000000e+00> : vector<2x256xf32>
    %66 = tpu.matmul %61, %7, %cst_31 {dimension_numbers = #tpu.dot_dimension_numbers<[1], [0], [0], [1], [0, 0, 1, 1], [], []>} : vector<2x64xf32>, vector<64x256xf32>, vector<2x256xf32> -> vector<2x256xf32>
    %c2_i32_32 = arith.constant 2 : i32
    %67 = arith.muli %c2_i32_30, %c2_i32_32 : i32
    %68 = arith.index_cast %67 : i32 to index
    %c0_33 = arith.constant 0 : index
    %69 = vector.load %arg11[%68, %c0_33] : memref<16x256xf32, #tpu.memory_space<vmem>>, vector<2x256xf32>
    %70 = arith.addf %66, %69 : vector<2x256xf32>
    %71 = arith.negf %70 : vector<2x256xf32>
    %72 = math.exp %71 : vector<2x256xf32>
    %cst_34 = arith.constant 1.000000e+00 : f32
    %73 = vector.broadcast %cst_34 : f32 to vector<2x256xf32>
    %74 = arith.addf %73, %72 : vector<2x256xf32>
    %75 = arith.divf %73, %74 : vector<2x256xf32>
    %76 = vector.extract_strided_slice %75 {offsets = [0, 0], sizes = [2, 64], strides = [1, 1]} : vector<2x256xf32> to vector<2x64xf32>
    %77 = vector.extract_strided_slice %75 {offsets = [0, 64], sizes = [2, 64], strides = [1, 1]} : vector<2x256xf32> to vector<2x64xf32>
    %78 = vector.extract_strided_slice %75 {offsets = [0, 128], sizes = [2, 64], strides = [1, 1]} : vector<2x256xf32> to vector<2x64xf32>
    %cst_35 = arith.constant 2.000000e+00 : f32
    %79 = vector.broadcast %cst_35 : f32 to vector<2x64xf32>
    %80 = arith.mulf %79, %78 : vector<2x64xf32>
    %cst_36 = arith.constant 1.000000e+00 : f32
    %81 = vector.broadcast %cst_36 : f32 to vector<2x64xf32>
    %82 = arith.subf %80, %81 : vector<2x64xf32>
    %83 = vector.extract_strided_slice %75 {offsets = [0, 192], sizes = [2, 64], strides = [1, 1]} : vector<2x256xf32> to vector<2x64xf32>
    %84 = arith.mulf %77, %59 : vector<2x64xf32>
    %85 = arith.mulf %76, %82 : vector<2x64xf32>
    %86 = arith.addf %84, %85 : vector<2x64xf32>
    %87 = math.tanh %86 : vector<2x64xf32>
    %88 = arith.mulf %83, %87 : vector<2x64xf32>
    %89 = arith.index_cast %c2_i32_30 : i32 to index
    %c0_37 = arith.constant 0 : index
    %c0_38 = arith.constant 0 : index
    %90 = vector.load %arg12[%89, %c0_37, %c0_38] : memref<8x2x64xf32, #tpu.memory_space<vmem>>, vector<1x2x64xf32>
    %91 = vector.shape_cast %90 : vector<1x2x64xf32> to vector<2x64xf32>
    %92 = vector.shape_cast %88 : vector<2x64xf32> to vector<1x2x64xf32>
    tpu.vector_store %arg12[%89, %c0_37, %c0_38], %92 {strides = array<i32>} : memref<8x2x64xf32, #tpu.memory_space<vmem>>, vector<1x2x64xf32>,
    %c3_i32 = arith.constant 3 : i32
    %cst_39 = arith.constant dense<0.000000e+00> : vector<2x256xf32>
    %93 = tpu.matmul %88, %7, %cst_39 {dimension_numbers = #tpu.dot_dimension_numbers<[1], [0], [0], [1], [0, 0, 1, 1], [], []>} : vector<2x64xf32>, vector<64x256xf32>, vector<2x256xf32> -> vector<2x256xf32>
    %c2_i32_40 = arith.constant 2 : i32
    %94 = arith.muli %c3_i32, %c2_i32_40 : i32
    %95 = arith.index_cast %94 : i32 to index
    %c0_41 = arith.constant 0 : index
    %96 = vector.load %arg11[%95, %c0_41] : memref<16x256xf32, #tpu.memory_space<vmem>>, vector<2x256xf32>
    %97 = arith.addf %93, %96 : vector<2x256xf32>
    %98 = arith.negf %97 : vector<2x256xf32>
    %99 = math.exp %98 : vector<2x256xf32>
    %cst_42 = arith.constant 1.000000e+00 : f32
    %100 = vector.broadcast %cst_42 : f32 to vector<2x256xf32>
    %101 = arith.addf %100, %99 : vector<2x256xf32>
    %102 = arith.divf %100, %101 : vector<2x256xf32>
    %103 = vector.extract_strided_slice %102 {offsets = [0, 0], sizes = [2, 64], strides = [1, 1]} : vector<2x256xf32> to vector<2x64xf32>
    %104 = vector.extract_strided_slice %102 {offsets = [0, 64], sizes = [2, 64], strides = [1, 1]} : vector<2x256xf32> to vector<2x64xf32>
    %105 = vector.extract_strided_slice %102 {offsets = [0, 128], sizes = [2, 64], strides = [1, 1]} : vector<2x256xf32> to vector<2x64xf32>
    %cst_43 = arith.constant 2.000000e+00 : f32
    %106 = vector.broadcast %cst_43 : f32 to vector<2x64xf32>
    %107 = arith.mulf %106, %105 : vector<2x64xf32>
    %cst_44 = arith.constant 1.000000e+00 : f32
    %108 = vector.broadcast %cst_44 : f32 to vector<2x64xf32>
    %109 = arith.subf %107, %108 : vector<2x64xf32>
    %110 = vector.extract_strided_slice %102 {offsets = [0, 192], sizes = [2, 64], strides = [1, 1]} : vector<2x256xf32> to vector<2x64xf32>
    %111 = arith.mulf %104, %86 : vector<2x64xf32>
    %112 = arith.mulf %103, %109 : vector<2x64xf32>
    %113 = arith.addf %111, %112 : vector<2x64xf32>
    %114 = math.tanh %113 : vector<2x64xf32>
    %115 = arith.mulf %110, %114 : vector<2x64xf32>
    %116 = arith.index_cast %c3_i32 : i32 to index
    %c0_45 = arith.constant 0 : index
    %c0_46 = arith.constant 0 : index
    %117 = vector.load %arg12[%116, %c0_45, %c0_46] : memref<8x2x64xf32, #tpu.memory_space<vmem>>, vector<1x2x64xf32>
    %118 = vector.shape_cast %117 : vector<1x2x64xf32> to vector<2x64xf32>
    %119 = vector.shape_cast %115 : vector<2x64xf32> to vector<1x2x64xf32>
    tpu.vector_store %arg12[%116, %c0_45, %c0_46], %119 {strides = array<i32>} : memref<8x2x64xf32, #tpu.memory_space<vmem>>, vector<1x2x64xf32>,
    %c4_i32 = arith.constant 4 : i32
    %cst_47 = arith.constant dense<0.000000e+00> : vector<2x256xf32>
    %120 = tpu.matmul %115, %7, %cst_47 {dimension_numbers = #tpu.dot_dimension_numbers<[1], [0], [0], [1], [0, 0, 1, 1], [], []>} : vector<2x64xf32>, vector<64x256xf32>, vector<2x256xf32> -> vector<2x256xf32>
    %c2_i32_48 = arith.constant 2 : i32
    %121 = arith.muli %c4_i32, %c2_i32_48 : i32
    %122 = arith.index_cast %121 : i32 to index
    %c0_49 = arith.constant 0 : index
    %123 = vector.load %arg11[%122, %c0_49] : memref<16x256xf32, #tpu.memory_space<vmem>>, vector<2x256xf32>
    %124 = arith.addf %120, %123 : vector<2x256xf32>
    %125 = arith.negf %124 : vector<2x256xf32>
    %126 = math.exp %125 : vector<2x256xf32>
    %cst_50 = arith.constant 1.000000e+00 : f32
    %127 = vector.broadcast %cst_50 : f32 to vector<2x256xf32>
    %128 = arith.addf %127, %126 : vector<2x256xf32>
    %129 = arith.divf %127, %128 : vector<2x256xf32>
    %130 = vector.extract_strided_slice %129 {offsets = [0, 0], sizes = [2, 64], strides = [1, 1]} : vector<2x256xf32> to vector<2x64xf32>
    %131 = vector.extract_strided_slice %129 {offsets = [0, 64], sizes = [2, 64], strides = [1, 1]} : vector<2x256xf32> to vector<2x64xf32>
    %132 = vector.extract_strided_slice %129 {offsets = [0, 128], sizes = [2, 64], strides = [1, 1]} : vector<2x256xf32> to vector<2x64xf32>
    %cst_51 = arith.constant 2.000000e+00 : f32
    %133 = vector.broadcast %cst_51 : f32 to vector<2x64xf32>
    %134 = arith.mulf %133, %132 : vector<2x64xf32>
    %cst_52 = arith.constant 1.000000e+00 : f32
    %135 = vector.broadcast %cst_52 : f32 to vector<2x64xf32>
    %136 = arith.subf %134, %135 : vector<2x64xf32>
    %137 = vector.extract_strided_slice %129 {offsets = [0, 192], sizes = [2, 64], strides = [1, 1]} : vector<2x256xf32> to vector<2x64xf32>
    %138 = arith.mulf %131, %113 : vector<2x64xf32>
    %139 = arith.mulf %130, %136 : vector<2x64xf32>
    %140 = arith.addf %138, %139 : vector<2x64xf32>
    %141 = math.tanh %140 : vector<2x64xf32>
    %142 = arith.mulf %137, %141 : vector<2x64xf32>
    %143 = arith.index_cast %c4_i32 : i32 to index
    %c0_53 = arith.constant 0 : index
    %c0_54 = arith.constant 0 : index
    %144 = vector.load %arg12[%143, %c0_53, %c0_54] : memref<8x2x64xf32, #tpu.memory_space<vmem>>, vector<1x2x64xf32>
    %145 = vector.shape_cast %144 : vector<1x2x64xf32> to vector<2x64xf32>
    %146 = vector.shape_cast %142 : vector<2x64xf32> to vector<1x2x64xf32>
    tpu.vector_store %arg12[%143, %c0_53, %c0_54], %146 {strides = array<i32>} : memref<8x2x64xf32, #tpu.memory_space<vmem>>, vector<1x2x64xf32>,
    %c5_i32 = arith.constant 5 : i32
    %cst_55 = arith.constant dense<0.000000e+00> : vector<2x256xf32>
    %147 = tpu.matmul %142, %7, %cst_55 {dimension_numbers = #tpu.dot_dimension_numbers<[1], [0], [0], [1], [0, 0, 1, 1], [], []>} : vector<2x64xf32>, vector<64x256xf32>, vector<2x256xf32> -> vector<2x256xf32>
    %c2_i32_56 = arith.constant 2 : i32
    %148 = arith.muli %c5_i32, %c2_i32_56 : i32
    %149 = arith.index_cast %148 : i32 to index
    %c0_57 = arith.constant 0 : index
    %150 = vector.load %arg11[%149, %c0_57] : memref<16x256xf32, #tpu.memory_space<vmem>>, vector<2x256xf32>
    %151 = arith.addf %147, %150 : vector<2x256xf32>
    %152 = arith.negf %151 : vector<2x256xf32>
    %153 = math.exp %152 : vector<2x256xf32>
    %cst_58 = arith.constant 1.000000e+00 : f32
    %154 = vector.broadcast %cst_58 : f32 to vector<2x256xf32>
    %155 = arith.addf %154, %153 : vector<2x256xf32>
    %156 = arith.divf %154, %155 : vector<2x256xf32>
    %157 = vector.extract_strided_slice %156 {offsets = [0, 0], sizes = [2, 64], strides = [1, 1]} : vector<2x256xf32> to vector<2x64xf32>
    %158 = vector.extract_strided_slice %156 {offsets = [0, 64], sizes = [2, 64], strides = [1, 1]} : vector<2x256xf32> to vector<2x64xf32>
    %159 = vector.extract_strided_slice %156 {offsets = [0, 128], sizes = [2, 64], strides = [1, 1]} : vector<2x256xf32> to vector<2x64xf32>
    %cst_59 = arith.constant 2.000000e+00 : f32
    %160 = vector.broadcast %cst_59 : f32 to vector<2x64xf32>
    %161 = arith.mulf %160, %159 : vector<2x64xf32>
    %cst_60 = arith.constant 1.000000e+00 : f32
    %162 = vector.broadcast %cst_60 : f32 to vector<2x64xf32>
    %163 = arith.subf %161, %162 : vector<2x64xf32>
    %164 = vector.extract_strided_slice %156 {offsets = [0, 192], sizes = [2, 64], strides = [1, 1]} : vector<2x256xf32> to vector<2x64xf32>
    %165 = arith.mulf %158, %140 : vector<2x64xf32>
    %166 = arith.mulf %157, %163 : vector<2x64xf32>
    %167 = arith.addf %165, %166 : vector<2x64xf32>
    %168 = math.tanh %167 : vector<2x64xf32>
    %169 = arith.mulf %164, %168 : vector<2x64xf32>
    %170 = arith.index_cast %c5_i32 : i32 to index
    %c0_61 = arith.constant 0 : index
    %c0_62 = arith.constant 0 : index
    %171 = vector.load %arg12[%170, %c0_61, %c0_62] : memref<8x2x64xf32, #tpu.memory_space<vmem>>, vector<1x2x64xf32>
    %172 = vector.shape_cast %171 : vector<1x2x64xf32> to vector<2x64xf32>
    %173 = vector.shape_cast %169 : vector<2x64xf32> to vector<1x2x64xf32>
    tpu.vector_store %arg12[%170, %c0_61, %c0_62], %173 {strides = array<i32>} : memref<8x2x64xf32, #tpu.memory_space<vmem>>, vector<1x2x64xf32>,
    %c6_i32 = arith.constant 6 : i32
    %cst_63 = arith.constant dense<0.000000e+00> : vector<2x256xf32>
    %174 = tpu.matmul %169, %7, %cst_63 {dimension_numbers = #tpu.dot_dimension_numbers<[1], [0], [0], [1], [0, 0, 1, 1], [], []>} : vector<2x64xf32>, vector<64x256xf32>, vector<2x256xf32> -> vector<2x256xf32>
    %c2_i32_64 = arith.constant 2 : i32
    %175 = arith.muli %c6_i32, %c2_i32_64 : i32
    %176 = arith.index_cast %175 : i32 to index
    %c0_65 = arith.constant 0 : index
    %177 = vector.load %arg11[%176, %c0_65] : memref<16x256xf32, #tpu.memory_space<vmem>>, vector<2x256xf32>
    %178 = arith.addf %174, %177 : vector<2x256xf32>
    %179 = arith.negf %178 : vector<2x256xf32>
    %180 = math.exp %179 : vector<2x256xf32>
    %cst_66 = arith.constant 1.000000e+00 : f32
    %181 = vector.broadcast %cst_66 : f32 to vector<2x256xf32>
    %182 = arith.addf %181, %180 : vector<2x256xf32>
    %183 = arith.divf %181, %182 : vector<2x256xf32>
    %184 = vector.extract_strided_slice %183 {offsets = [0, 0], sizes = [2, 64], strides = [1, 1]} : vector<2x256xf32> to vector<2x64xf32>
    %185 = vector.extract_strided_slice %183 {offsets = [0, 64], sizes = [2, 64], strides = [1, 1]} : vector<2x256xf32> to vector<2x64xf32>
    %186 = vector.extract_strided_slice %183 {offsets = [0, 128], sizes = [2, 64], strides = [1, 1]} : vector<2x256xf32> to vector<2x64xf32>
    %cst_67 = arith.constant 2.000000e+00 : f32
    %187 = vector.broadcast %cst_67 : f32 to vector<2x64xf32>
    %188 = arith.mulf %187, %186 : vector<2x64xf32>
    %cst_68 = arith.constant 1.000000e+00 : f32
    %189 = vector.broadcast %cst_68 : f32 to vector<2x64xf32>
    %190 = arith.subf %188, %189 : vector<2x64xf32>
    %191 = vector.extract_strided_slice %183 {offsets = [0, 192], sizes = [2, 64], strides = [1, 1]} : vector<2x256xf32> to vector<2x64xf32>
    %192 = arith.mulf %185, %167 : vector<2x64xf32>
    %193 = arith.mulf %184, %190 : vector<2x64xf32>
    %194 = arith.addf %192, %193 : vector<2x64xf32>
    %195 = math.tanh %194 : vector<2x64xf32>
    %196 = arith.mulf %191, %195 : vector<2x64xf32>
    %197 = arith.index_cast %c6_i32 : i32 to index
    %c0_69 = arith.constant 0 : index
    %c0_70 = arith.constant 0 : index
    %198 = vector.load %arg12[%197, %c0_69, %c0_70] : memref<8x2x64xf32, #tpu.memory_space<vmem>>, vector<1x2x64xf32>
    %199 = vector.shape_cast %198 : vector<1x2x64xf32> to vector<2x64xf32>
    %200 = vector.shape_cast %196 : vector<2x64xf32> to vector<1x2x64xf32>
    tpu.vector_store %arg12[%197, %c0_69, %c0_70], %200 {strides = array<i32>} : memref<8x2x64xf32, #tpu.memory_space<vmem>>, vector<1x2x64xf32>,
    %c7_i32 = arith.constant 7 : i32
    %cst_71 = arith.constant dense<0.000000e+00> : vector<2x256xf32>
    %201 = tpu.matmul %196, %7, %cst_71 {dimension_numbers = #tpu.dot_dimension_numbers<[1], [0], [0], [1], [0, 0, 1, 1], [], []>} : vector<2x64xf32>, vector<64x256xf32>, vector<2x256xf32> -> vector<2x256xf32>
    %c2_i32_72 = arith.constant 2 : i32
    %202 = arith.muli %c7_i32, %c2_i32_72 : i32
    %203 = arith.index_cast %202 : i32 to index
    %c0_73 = arith.constant 0 : index
    %204 = vector.load %arg11[%203, %c0_73] : memref<16x256xf32, #tpu.memory_space<vmem>>, vector<2x256xf32>
    %205 = arith.addf %201, %204 : vector<2x256xf32>
    %206 = arith.negf %205 : vector<2x256xf32>
    %207 = math.exp %206 : vector<2x256xf32>
    %cst_74 = arith.constant 1.000000e+00 : f32
    %208 = vector.broadcast %cst_74 : f32 to vector<2x256xf32>
    %209 = arith.addf %208, %207 : vector<2x256xf32>
    %210 = arith.divf %208, %209 : vector<2x256xf32>
    %211 = vector.extract_strided_slice %210 {offsets = [0, 0], sizes = [2, 64], strides = [1, 1]} : vector<2x256xf32> to vector<2x64xf32>
    %212 = vector.extract_strided_slice %210 {offsets = [0, 64], sizes = [2, 64], strides = [1, 1]} : vector<2x256xf32> to vector<2x64xf32>
    %213 = vector.extract_strided_slice %210 {offsets = [0, 128], sizes = [2, 64], strides = [1, 1]} : vector<2x256xf32> to vector<2x64xf32>
    %cst_75 = arith.constant 2.000000e+00 : f32
    %214 = vector.broadcast %cst_75 : f32 to vector<2x64xf32>
    %215 = arith.mulf %214, %213 : vector<2x64xf32>
    %cst_76 = arith.constant 1.000000e+00 : f32
    %216 = vector.broadcast %cst_76 : f32 to vector<2x64xf32>
    %217 = arith.subf %215, %216 : vector<2x64xf32>
    %218 = vector.extract_strided_slice %210 {offsets = [0, 192], sizes = [2, 64], strides = [1, 1]} : vector<2x256xf32> to vector<2x64xf32>
    %219 = arith.mulf %212, %194 : vector<2x64xf32>
    %220 = arith.mulf %211, %217 : vector<2x64xf32>
    %221 = arith.addf %219, %220 : vector<2x64xf32>
    %222 = math.tanh %221 : vector<2x64xf32>
    %223 = arith.mulf %218, %222 : vector<2x64xf32>
    %224 = arith.index_cast %c7_i32 : i32 to index
    %c0_77 = arith.constant 0 : index
    %c0_78 = arith.constant 0 : index
    %225 = vector.load %arg12[%224, %c0_77, %c0_78] : memref<8x2x64xf32, #tpu.memory_space<vmem>>, vector<1x2x64xf32>
    %226 = vector.shape_cast %225 : vector<1x2x64xf32> to vector<2x64xf32>
    %227 = vector.shape_cast %223 : vector<2x64xf32> to vector<1x2x64xf32>
    tpu.vector_store %arg12[%224, %c0_77, %c0_78], %227 {strides = array<i32>} : memref<8x2x64xf32, #tpu.memory_space<vmem>>, vector<1x2x64xf32>,
    %c8_i32 = arith.constant 8 : i32
    %c0_79 = arith.constant 0 : index
    %c0_80 = arith.constant 0 : index
    %c0_81 = arith.constant 0 : index
    %228 = vector.load %arg9[%c0_79, %c0_80, %c0_81] : memref<1x2x64xf32, #tpu.memory_space<vmem>>, vector<1x2x64xf32>
    %229 = vector.shape_cast %228 : vector<1x2x64xf32> to vector<2x64xf32>
    %230 = vector.shape_cast %223 : vector<2x64xf32> to vector<1x2x64xf32>
    tpu.vector_store %arg9[%c0_79, %c0_80, %c0_81], %230 {strides = array<i32>} : memref<1x2x64xf32, #tpu.memory_space<vmem>>, vector<1x2x64xf32>,
    %c0_82 = arith.constant 0 : index
    %c0_83 = arith.constant 0 : index
    %c0_84 = arith.constant 0 : index
    %231 = vector.load %arg10[%c0_82, %c0_83, %c0_84] : memref<1x2x64xf32, #tpu.memory_space<vmem>>, vector<1x2x64xf32>
    %232 = vector.shape_cast %231 : vector<1x2x64xf32> to vector<2x64xf32>
    %233 = vector.shape_cast %221 : vector<2x64xf32> to vector<1x2x64xf32>
    tpu.vector_store %arg10[%c0_82, %c0_83, %c0_84], %233 {strides = array<i32>} : memref<1x2x64xf32, #tpu.memory_space<vmem>>, vector<1x2x64xf32>,
    %c0_85 = arith.constant 0 : index
    %c0_86 = arith.constant 0 : index
    %c0_87 = arith.constant 0 : index
    %234 = vector.load %arg12[%c0_85, %c0_86, %c0_87] : memref<8x2x64xf32, #tpu.memory_space<vmem>>, vector<8x2x64xf32>
    %c0_88 = arith.constant 0 : index
    %c0_89 = arith.constant 0 : index
    %235 = vector.load %arg6[%c0_88, %c0_89] : memref<1x64xf32, #tpu.memory_space<vmem>>, vector<1x64xf32>
    %236 = vector.shape_cast %235 : vector<1x64xf32> to vector<1x1x64xf32>
    %237 = vector.broadcast %236 : vector<1x1x64xf32> to vector<8x2x64xf32>
    %238 = arith.mulf %234, %237 : vector<8x2x64xf32>
    %cst_90 = arith.constant dense<0.000000e+00> : vector<8x2xf32>
    %239 = vector.multi_reduction <add>, %238, %cst_90 [2] : vector<8x2x64xf32> to vector<8x2xf32>
    %c0_91 = arith.constant 0 : index
    %c0_92 = arith.constant 0 : index
    %240 = memref.load %arg7[%c0_91, %c0_92] : memref<1x1xf32, #tpu.memory_space<smem>>
    %241 = vector.broadcast %240 : f32 to vector<8x2xf32>
    %242 = arith.addf %239, %241 : vector<8x2xf32>
    %243 = arith.negf %242 : vector<8x2xf32>
    %244 = math.exp %243 : vector<8x2xf32>
    %cst_93 = arith.constant 1.000000e+00 : f32
    %245 = vector.broadcast %cst_93 : f32 to vector<8x2xf32>
    %246 = arith.addf %245, %244 : vector<8x2xf32>
    %247 = arith.divf %245, %246 : vector<8x2xf32>
    %248 = tpu.transpose %247, [1, 0] : vector<8x2xf32> -> vector<2x8xf32>
    %c0_94 = arith.constant 0 : index
    %c0_95 = arith.constant 0 : index
    %249 = vector.load %arg8[%c0_94, %c0_95] : memref<2x8xf32, #tpu.memory_space<vmem>>, vector<2x8xf32>
    tpu.vector_store %arg8[%c0_94, %c0_95], %248 {strides = array<i32>} : memref<2x8xf32, #tpu.memory_space<vmem>>, vector<2x8xf32>,
    return
  }
}

</mosaic_0001>

<llo_original>
// kernel: mylstm_forward.1
$region0: #{mylstm_forward.1}
  #allocation0 [shape = 'u32[]', space=smem, size = 0x4, offset = 0x4, fixed_abs, tag = 'smem constant byte address 0x4 - core index']
  #allocation1 [shape = 'u32[144,128]{1,0:T(1,128)}', space=vmem, size = 0x12000, scoped, tag = 'internal scratch']
  #allocation2 [shape = 'f32[16,256]{1,0:T(8,128)}', space=vmem, size = 0x4000, scoped, tag = 'scratch operand']
  #allocation3 [shape = 'f32[8,2,64]{2,1,0:T(2,128)}', space=vmem, size = 0x2000, scoped, tag = 'scratch operand']
  #allocation4 [shape = 'f32[1,1]{1,0:T(1,128)S(6)}', space=smem, size = 0x200, scoped, tag = 'scoped memory for mylstm_forward.1']
  %s0 = inlined_call_operand.vmem [shape: f32[16,44], index: 0, kind: input, shape index: {}]
  %s1 = inlined_call_operand.vmem [shape: f32[1,2,64], index: 1, kind: input, shape index: {}]
  %s2 = inlined_call_operand.vmem [shape: f32[1,2,64], index: 2, kind: input, shape index: {}]
  %s3 = inlined_call_operand.hbm [shape: f32[44,256], index: 3, kind: input, shape index: {}]
  %s4 = inlined_call_operand.hbm [shape: f32[64,256], index: 4, kind: input, shape index: {}]
  %s5 = inlined_call_operand.vmem [shape: f32[1,256], index: 5, kind: input, shape index: {}]
  %s6 = inlined_call_operand.vmem [shape: f32[1,64], index: 6, kind: input, shape index: {}]
  %s7 = inlined_call_operand.<no memory space> [shape: f32[1,1], index: 7, kind: input, shape index: {}]
  %s8 = inlined_call_operand.hbm [shape: f32[2,8], index: 8, kind: output, shape index: {0}]
  %s9 = inlined_call_operand.hbm [shape: f32[1,2,64], index: 9, kind: output, shape index: {1}]
  %s10 = inlined_call_operand.hbm [shape: f32[1,2,64], index: 10, kind: output, shape index: {2}]
  %11 = xla_tuple %s8, %s9, %s10
  %s12 = sld [smem:[#allocation0]]
  $region66: #{mylstm_forward.1} parent=0
    _
  %s14 = ssub.s32 1, %s12
  %s15 = scalar_select 0, %s14, %s12
  %16 = sst [smem:[#allocation4]] %s7
  $region1: #{mylstm_forward.1} parent=0
    #allocation5 [shape = 'u8[49152]{0}', space=vmem, size = 0xc000, scoped, tag = 'input window, operand 3, single buffered']
    #allocation6 [shape = 's32[1]{0}', space=sflag, size = 0x4, scoped, tag = 'scoped memory for mylstm_forward.1']
    #allocation7 [shape = 's32[1]{0}', space=sflag, size = 0x4, scoped, tag = 'scoped memory for mylstm_forward.1']
    #allocation8 [shape = 'u8[65536]{0}', space=vmem, size = 0x10000, scoped, tag = 'input window, operand 4, single buffered']
    #allocation9 [shape = 's32[1]{0}', space=sflag, size = 0x4, scoped, tag = 'scoped memory for mylstm_forward.1']
    #allocation10 [shape = 'u8[1024]{0}', space=vmem, size = 0x400, scoped, tag = 'output window, operand 0, single buffered']
    #allocation11 [shape = 'u8[1024]{0}', space=vmem, size = 0x400, scoped, tag = 'output window, operand 1, single buffered']
    #allocation12 [shape = 's32[1]{0}', space=sflag, size = 0x4, scoped, tag = 'scoped memory for mylstm_forward.1']
    #allocation13 [shape = 'u8[1024]{0}', space=vmem, size = 0x400, scoped, tag = 'output window, operand 2, single buffered']
    %17 = vsyncpa [#allocation6], 0
    %18 = vsyncpa [#allocation9], 0
    %19 = vsyncpa [#allocation7], 0
    %20 = vsyncpa [#allocation12], 0
    // Predicated region
    $region2: #{mylstm_forward.1} parent=1 // pred_check
      _
    $region3: #{mylstm_forward.1} parent=1 // pred_check_branch
      %22 = sbr.rel (0) target = $region5
    $region4: #{mylstm_forward.1} parent=1 // pred_region
      _
    $region5: #{mylstm_forward.1} parent=1 // pred_fallthru
      _
    // Predicated region
    $region6: #{mylstm_forward.1} parent=1 // pred_check
      _
    $region7: #{mylstm_forward.1} parent=1 // pred_check_branch
      %24 = sbr.rel (0) target = $region9
    $region8: #{mylstm_forward.1} parent=1 // pred_region
      _
    $region9: #{mylstm_forward.1} parent=1 // pred_fallthru
      _
    // Predicated region
    $region10: #{mylstm_forward.1} parent=1 // pred_check
      _
    $region11: #{mylstm_forward.1} parent=1 // pred_check_branch
      %26 = sbr.rel (0) target = $region13
    $region12: #{mylstm_forward.1} parent=1 // pred_region
      _
    $region13: #{mylstm_forward.1} parent=1 // pred_fallthru
      _
    // Predicated region
    $region14: #{mylstm_forward.1} parent=1 // pred_check
      _
    $region15: #{mylstm_forward.1} parent=1 // pred_check_branch
      %28 = sbr.rel (0) target = $region17
    $region16: #{mylstm_forward.1} parent=1 // pred_region
      %s30 = ssub.s32 1536, 1536
      %31 = vsyncadd [#allocation6], %s30
      %s32 = sshll.u32 [#allocation5], 4
      %s33 = int_to_ptr.vmem [resolvable:$true] %s32
      %38 = dma.hbm_to_vmem [thread:$0]  %s3, 1536, %s33, [#allocation6], 256, 256, 16
    $region17: #{mylstm_forward.1} parent=1 // pred_fallthru
      _
    // Predicated region
    $region18: #{mylstm_forward.1} parent=1 // pred_check
      _
    $region19: #{mylstm_forward.1} parent=1 // pred_check_branch
      %40 = sbr.rel (0) target = $region21
    $region20: #{mylstm_forward.1} parent=1 // pred_region
      %s42 = ssub.s32 2048, 2048
      %43 = vsyncadd [#allocation9], %s42
      %s44 = sshll.u32 [#allocation8], 4
      %s45 = int_to_ptr.vmem [resolvable:$true] %s44
      %50 = dma.hbm_to_vmem [thread:$0]  %s4, 2048, %s45, [#allocation9], 256, 256, 16
    $region21: #{mylstm_forward.1} parent=1 // pred_fallthru
      _
    // Predicated region
    $region22: #{mylstm_forward.1} parent=1 // pred_check
      _
    $region23: #{mylstm_forward.1} parent=1 // pred_check_branch
      %52 = sbr.rel (0) target = $region25
    $region24: #{mylstm_forward.1} parent=1 // pred_region
      _
    $region25: #{mylstm_forward.1} parent=1 // pred_fallthru
      _
    // Predicated region
    $region26: #{mylstm_forward.1} parent=1 // pred_check
      _
    $region27: #{mylstm_forward.1} parent=1 // pred_check_branch
      %54 = sbr.rel (0) target = $region29
    $region28: #{mylstm_forward.1} parent=1 // pred_region
      _
    $region29: #{mylstm_forward.1} parent=1 // pred_fallthru
      _
    // Predicated region
    $region30: #{mylstm_forward.1} parent=1 // pred_check
      _
    $region31: #{mylstm_forward.1} parent=1 // pred_check_branch
      %56 = sbr.rel (0) target = $region33
    $region32: #{mylstm_forward.1} parent=1 // pred_region
      _
    $region33: #{mylstm_forward.1} parent=1 // pred_fallthru
      _
    // Predicated region
    $region34: #{mylstm_forward.1} parent=1 // pred_check
      _
    $region35: #{mylstm_forward.1} parent=1 // pred_check_branch
      %58 = sbr.rel (0) target = $region37
    $region36: #{mylstm_forward.1} parent=1 // pred_region
      %59 = dma.done [#allocation6], 1536
    $region37: #{mylstm_forward.1} parent=1 // pred_fallthru
      _
    // Predicated region
    $region38: #{mylstm_forward.1} parent=1 // pred_check
      _
    $region39: #{mylstm_forward.1} parent=1 // pred_check_branch
      %61 = sbr.rel (0) target = $region41
    $region40: #{mylstm_forward.1} parent=1 // pred_region
      %62 = dma.done [#allocation9], 2048
    $region41: #{mylstm_forward.1} parent=1 // pred_fallthru
      _
    %v63 = vld [vmem:[%s0] sm:$0xff]
    %v64 = vld [vmem:[%s0 + $0x8] sm:$0xff]
    %v65 = vld [vmem:[#allocation5] sm:$0xff]
    %v66 = vld [vmem:[#allocation5 + $0x8] sm:$0xff]
    %v67 = vld [vmem:[#allocation5 + $0x10] sm:$0xff]
    %v68 = vld [vmem:[#allocation5 + $0x18] sm:$0xff]
    %v69 = vld [vmem:[#allocation5 + $0x20] sm:$0xff]
    %v70 = vld [vmem:[#allocation5 + $0x28] sm:$0xff]
    %v71 = vld [vmem:[#allocation5 + $0x30] sm:$0xff]
    %v72 = vld [vmem:[#allocation5 + $0x38] sm:$0xff]
    %v73 = vld [vmem:[#allocation5 + $0x40] sm:$0xff]
    %v74 = vld [vmem:[#allocation5 + $0x48] sm:$0xff]
    %v75 = vld [vmem:[#allocation5 + $0x50] sm:$0xf]
    %v76 = vld [vmem:[#allocation5 + $0x58] sm:$0xf]
    %v77 = vld [vmem:[%s5] sm:$0x3]
    %v79 = vlaneseq
    %v80 = vshrl.u32 %v79, 7
    %v81 = vsub.s32 0, %v80
    %v82 = vrot.slane %v77, %v81
    %v83 = vlaneseq
    %v84 = vshrl.u32 %v83, 7
    %v85 = vsub.s32 1, %v84
    %v86 = vrot.slane %v77, %v85
    %vm89 = vcmask 359424
    %v91 = vsel %vm89, %v63, 0
    %v94 = vsel %vm89, %v64, 0
    %vm96 = vcmask 1043456
    %v98 = vsel %vm96, %v75, 0
    %v101 = vsel %vm96, %v76, 0
    %103 = vmatprep.subr.mxu0 %v66
    %104 = vmatpush1.msra.mxu0 %v65
    %105 = vmatprep.subr.mxu0 %v68
    %106 = vmatpush1.msra.mxu0 %v67
    %107 = vmatprep.subr.mxu0 %v70
    %108 = vmatpush1.msra.mxu0 %v69
    %109 = vmatprep.subr.mxu0 %v72
    %110 = vmatpush1.msra.mxu0 %v71
    %111 = vmatprep.subr.mxu0 %v74
    %112 = vmatpush1.msra.mxu0 %v73
    %113 = vmatprep.subr.mxu0 %v101
    %114 = vmatpush1.msra.mxu0 %v98
    %115 = vmatprep.subr.mxu0 0.0
    %116 = vmatpush1.msra.mxu0 0.0
    %117 = vmatprep.subr.mxu0 0.0
    %118 = vmatpush1.msra.mxu0 0.0
    %119 = vmatprep.subr.mxu0 0.0
    %120 = vmatpush1.msra.mxu0 0.0
    %121 = vmatprep.subr.mxu0 0.0
    %122 = vmatpush1.msra.mxu0 0.0
    %123 = vmatprep.subr.mxu0 0.0
    %124 = vmatpush1.msra.mxu0 0.0
    %125 = vmatprep.subr.mxu0 0.0
    %126 = vmatpush1.msra.mxu0 0.0
    %127 = vmatprep.subr.mxu0 0.0
    %128 = vmatpush1.msra.mxu0 0.0
    %129 = vmatprep.subr.mxu0 0.0
    %130 = vmatpush1.msra.mxu0 0.0
    %131 = vmatprep.subr.mxu0 0.0
    %132 = vmatpush1.msra.mxu0 0.0
    %133 = vmatprep.subr.mxu0 0.0
    %134 = vmatpush1.msra.mxu0 0.0
    %135 = vmatprep.subr.mxu0 0.0
    %136 = vmatpush1.msra.mxu0 0.0
    %137 = vmatprep.subr.mxu0 0.0
    %138 = vmatpush1.msra.mxu0 0.0
    %139 = vmatprep.subr.mxu0 0.0
    %140 = vmatpush1.msra.mxu0 0.0
    %141 = vmatprep.subr.mxu0 0.0
    %142 = vmatpush1.msra.mxu0 0.0
    %143 = vmatprep.subr.mxu0 0.0
    %144 = vmatpush1.msra.mxu0 0.0
    %145 = vmatprep.subr.mxu0 0.0
    %146 = vmatpush1.msra.mxu0 0.0
    %147 = vmatprep.subr.mxu0 0.0
    %148 = vmatpush1.msra.mxu0 0.0
    %149 = vmatprep.subr.mxu0 0.0
    %150 = vmatpush1.msra.mxu0 0.0
    %151 = vmatprep.subr.mxu0 0.0
    %152 = vmatpush1.msra.mxu0 0.0
    %153 = vmatprep.subr.mxu0 0.0
    %154 = vmatpush1.msra.mxu0 0.0
    %155 = vmatprep.subr.mxu0 0.0
    %156 = vmatpush1.msra.mxu0 0.0
    %157 = vmatprep.subr.mxu0 0.0
    %158 = vmatpush1.msra.mxu0 0.0
    %159 = vmatprep.subr.mxu0 0.0
    %160 = vmatpush1.msra.mxu0 0.0
    %161 = vmatprep.subr.mxu0 0.0
    %162 = vmatpush1.msra.mxu0 0.0
    %163 = vmatprep.subr.mxu0 0.0
    %164 = vmatpush1.msra.mxu0 0.0
    %165 = vmatprep.subr.mxu0 0.0
    %166 = vmatpush1.msra.mxu0 0.0
    %167 = vmatprep.mubr.f32.mxu0 0.0
    %168 = vmatmul.mubr.f32.gmra.mrb[0].mxu0 %v91
    %v169 = vpop.f32.mrb[0].mxu0
    %v170 = vadd.f32 %v82, %v169
    %v171 = vpop.f32.mrb[0].mxu0
    %v172 = vadd.f32 %v86, %v171
    %173 = vmatprep.mubr.f32.mxu0 0.0
    %174 = vmatmul.mubr.f32.gmra.mrb[0].mxu0 %v94
    %v175 = vpop.f32.mrb[0].mxu0
    %v176 = vadd.f32 %v82, %v175
    %v177 = vpop.f32.mrb[0].mxu0
    %v178 = vadd.f32 %v86, %v177
    %179 = vdwg.mxu0
    %180 = vst [vmem:[#allocation2] sm:$0xff] %v170
    %181 = vst [vmem:[#allocation2 + $0x8] sm:$0xff] %v172
    %182 = vst [vmem:[#allocation2 + $0x10] sm:$0xff] %v176
    %183 = vst [vmem:[#allocation2 + $0x18] sm:$0xff] %v178
    %v184 = vld [vmem:[#allocation8] sm:$0xff]
    %v185 = vld [vmem:[#allocation8 + $0x8] sm:$0xff]
    %v186 = vld [vmem:[#allocation8 + $0x10] sm:$0xff]
    %v187 = vld [vmem:[#allocation8 + $0x18] sm:$0xff]
    %v188 = vld [vmem:[#allocation8 + $0x20] sm:$0xff]
    %v189 = vld [vmem:[#allocation8 + $0x28] sm:$0xff]
    %v190 = vld [vmem:[#allocation8 + $0x30] sm:$0xff]
    %v191 = vld [vmem:[#allocation8 + $0x38] sm:$0xff]
    %v192 = vld [vmem:[#allocation8 + $0x40] sm:$0xff]
    %v193 = vld [vmem:[#allocation8 + $0x48] sm:$0xff]
    %v194 = vld [vmem:[#allocation8 + $0x50] sm:$0xff]
    %v195 = vld [vmem:[#allocation8 + $0x58] sm:$0xff]
    %v196 = vld [vmem:[#allocation8 + $0x60] sm:$0xff]
    %v197 = vld [vmem:[#allocation8 + $0x68] sm:$0xff]
    %v198 = vld [vmem:[#allocation8 + $0x70] sm:$0xff]
    %v199 = vld [vmem:[#allocation8 + $0x78] sm:$0xff]
    %v200 = vld [vmem:[%s1] sm:$0x3]
    %v201 = vld [vmem:[%s2] sm:$0x3]
    %v202 = vld [vmem:[#allocation2] sm:$0x3]
    %v203 = vld [vmem:[#allocation2 + $0x8] sm:$0x3]
    %vm204 = vcmask 523264
    %v206 = vsel %vm204, %v200, 0
    %208 = vmatprep.subr.mxu0 %v185
    %209 = vmatpush1.msra.mxu0 %v184
    %210 = vmatprep.subr.mxu0 %v187
    %211 = vmatpush1.msra.mxu0 %v186
    %212 = vmatprep.subr.mxu0 %v189
    %213 = vmatpush1.msra.mxu0 %v188
    %214 = vmatprep.subr.mxu0 %v191
    %215 = vmatpush1.msra.mxu0 %v190
    %216 = vmatprep.subr.mxu0 %v193
    %217 = vmatpush1.msra.mxu0 %v192
    %218 = vmatprep.subr.mxu0 %v195
    %219 = vmatpush1.msra.mxu0 %v194
    %220 = vmatprep.subr.mxu0 %v197
    %221 = vmatpush1.msra.mxu0 %v196
    %222 = vmatprep.subr.mxu0 %v199
    %223 = vmatpush1.msra.mxu0 %v198
    %224 = vmatprep.subr.mxu0 0.0
    %225 = vmatpush1.msra.mxu0 0.0
    %226 = vmatprep.subr.mxu0 0.0
    %227 = vmatpush1.msra.mxu0 0.0
    %228 = vmatprep.subr.mxu0 0.0
    %229 = vmatpush1.msra.mxu0 0.0
    %230 = vmatprep.subr.mxu0 0.0
    %231 = vmatpush1.msra.mxu0 0.0
    %232 = vmatprep.subr.mxu0 0.0
    %233 = vmatpush1.msra.mxu0 0.0
    %234 = vmatprep.subr.mxu0 0.0
    %235 = vmatpush1.msra.mxu0 0.0
    %236 = vmatprep.subr.mxu0 0.0
    %237 = vmatpush1.msra.mxu0 0.0
    %238 = vmatprep.subr.mxu0 0.0
    %239 = vmatpush1.msra.mxu0 0.0
    %240 = vmatprep.subr.mxu0 0.0
    %241 = vmatpush1.msra.mxu0 0.0
    %242 = vmatprep.subr.mxu0 0.0
    %243 = vmatpush1.msra.mxu0 0.0
    %244 = vmatprep.subr.mxu0 0.0
    %245 = vmatpush1.msra.mxu0 0.0
    %246 = vmatprep.subr.mxu0 0.0
    %247 = vmatpush1.msra.mxu0 0.0
    %248 = vmatprep.subr.mxu0 0.0
    %249 = vmatpush1.msra.mxu0 0.0
    %250 = vmatprep.subr.mxu0 0.0
    %251 = vmatpush1.msra.mxu0 0.0
    %252 = vmatprep.subr.mxu0 0.0
    %253 = vmatpush1.msra.mxu0 0.0
    %254 = vmatprep.subr.mxu0 0.0
    %255 = vmatpush1.msra.mxu0 0.0
    %256 = vmatprep.subr.mxu0 0.0
    %257 = vmatpush1.msra.mxu0 0.0
    %258 = vmatprep.subr.mxu0 0.0
    %259 = vmatpush1.msra.mxu0 0.0
    %260 = vmatprep.subr.mxu0 0.0
    %261 = vmatpush1.msra.mxu0 0.0
    %262 = vmatprep.subr.mxu0 0.0
    %263 = vmatpush1.msra.mxu0 0.0
    %264 = vmatprep.subr.mxu0 0.0
    %265 = vmatpush1.msra.mxu0 0.0
    %266 = vmatprep.subr.mxu0 0.0
    %267 = vmatpush1.msra.mxu0 0.0
    %268 = vmatprep.subr.mxu0 0.0
    %269 = vmatpush1.msra.mxu0 0.0
    %270 = vmatprep.subr.mxu0 0.0
    %271 = vmatpush1.msra.mxu0 0.0
    %272 = vmatprep.mubr.f32.mxu0 0.0
    %273 = vmatmul.mubr.f32.gmra.mrb[0].mxu0 %v206
    %v274 = vpop.f32.mrb[0].mxu0
    %v275 = vadd.f32 %v202, %v274
    %v276 = vpop.f32.mrb[0].mxu0
    %v277 = vadd.f32 %v203, %v276
    %278 = vdwg.mxu0
    %v279 = vxor.u32 %v275, 2147483648
    %v280 = vxor.u32 %v277, 2147483648
    %v281 = vmul.f32 %v279, 1.442695
    %v282 = vpow.pop %v281
    %v283 = vmul.f32 %v280, 1.442695
    %v284 = vpow.pop %v283
    %v285 = vadd.f32 %v282, 1.0
    %v286 = vadd.f32 %v284, 1.0
    %v287 = vrcp.pop %v285
    %v288 = vmul.f32 1.0, %v287
    %v289 = vrcp.pop %v286
    %v290 = vmul.f32 1.0, %v289
    %v291 = vmul.f32 %v290, 2.0
    %v292 = vsub.f32 %v291, 1.0
    %294 = vrot.lane.b32.xlu0 %v201, 64
    %v295 = vpop.permute.xlu0 %294
    %v297 = vmul.f32 %v288, %v295
    %v298 = vmul.f32 %v288, %v292
    %300 = vrot.lane.b32.xlu0 %v298, 64
    %v301 = vpop.permute.xlu0 %300
    %v303 = vadd.f32 %v297, %v301
    %v304 = vtanh.pop %v303
    %v305 = vmul.f32 %v290, %v304
    %307 = vrot.lane.b32.xlu0 %v305, 64
    %v308 = vpop.permute.xlu0 %307
    %vm310 = vcmask 517120
    %311 = vst.msk [vmem:[#allocation3] sm:$0x3] %vm310, %v308
    %v312 = vld [vmem:[#allocation2] sm:$0xc]
    %v313 = vld [vmem:[#allocation2 + $0x8] sm:$0xc]
    %v316 = vrot.slane %v312, 2
    %v317 = vrot.slane %v313, 2
    %v320 = vsel %vm204, %v308, 0
    %322 = vmatprep.subr.mxu0 %v185
    %323 = vmatpush1.msra.mxu0 %v184
    %324 = vmatprep.subr.mxu0 %v187
    %325 = vmatpush1.msra.mxu0 %v186
    %326 = vmatprep.subr.mxu0 %v189
    %327 = vmatpush1.msra.mxu0 %v188
    %328 = vmatprep.subr.mxu0 %v191
    %329 = vmatpush1.msra.mxu0 %v190
    %330 = vmatprep.subr.mxu0 %v193
    %331 = vmatpush1.msra.mxu0 %v192
    %332 = vmatprep.subr.mxu0 %v195
    %333 = vmatpush1.msra.mxu0 %v194
    %334 = vmatprep.subr.mxu0 %v197
    %335 = vmatpush1.msra.mxu0 %v196
    %336 = vmatprep.subr.mxu0 %v199
    %337 = vmatpush1.msra.mxu0 %v198
    %338 = vmatprep.subr.mxu0 0.0
    %339 = vmatpush1.msra.mxu0 0.0
    %340 = vmatprep.subr.mxu0 0.0
    %341 = vmatpush1.msra.mxu0 0.0
    %342 = vmatprep.subr.mxu0 0.0
    %343 = vmatpush1.msra.mxu0 0.0
    %344 = vmatprep.subr.mxu0 0.0
    %345 = vmatpush1.msra.mxu0 0.0
    %346 = vmatprep.subr.mxu0 0.0
    %347 = vmatpush1.msra.mxu0 0.0
    %348 = vmatprep.subr.mxu0 0.0
    %349 = vmatpush1.msra.mxu0 0.0
    %350 = vmatprep.subr.mxu0 0.0
    %351 = vmatpush1.msra.mxu0 0.0
    %352 = vmatprep.subr.mxu0 0.0
    %353 = vmatpush1.msra.mxu0 0.0
    %354 = vmatprep.subr.mxu0 0.0
    %355 = vmatpush1.msra.mxu0 0.0
    %356 = vmatprep.subr.mxu0 0.0
    %357 = vmatpush1.msra.mxu0 0.0
    %358 = vmatprep.subr.mxu0 0.0
    %359 = vmatpush1.msra.mxu0 0.0
    %360 = vmatprep.subr.mxu0 0.0
    %361 = vmatpush1.msra.mxu0 0.0
    %362 = vmatprep.subr.mxu0 0.0
    %363 = vmatpush1.msra.mxu0 0.0
    %364 = vmatprep.subr.mxu0 0.0
    %365 = vmatpush1.msra.mxu0 0.0
    %366 = vmatprep.subr.mxu0 0.0
    %367 = vmatpush1.msra.mxu0 0.0
    %368 = vmatprep.subr.mxu0 0.0
    %369 = vmatpush1.msra.mxu0 0.0
    %370 = vmatprep.subr.mxu0 0.0
    %371 = vmatpush1.msra.mxu0 0.0
    %372 = vmatprep.subr.mxu0 0.0
    %373 = vmatpush1.msra.mxu0 0.0
    %374 = vmatprep.subr.mxu0 0.0
    %375 = vmatpush1.msra.mxu0 0.0
    %376 = vmatprep.subr.mxu0 0.0
    %377 = vmatpush1.msra.mxu0 0.0
    %378 = vmatprep.subr.mxu0 0.0
    %379 = vmatpush1.msra.mxu0 0.0
    %380 = vmatprep.subr.mxu0 0.0
    %381 = vmatpush1.msra.mxu0 0.0
    %382 = vmatprep.subr.mxu0 0.0
    %383 = vmatpush1.msra.mxu0 0.0
    %384 = vmatprep.subr.mxu0 0.0
    %385 = vmatpush1.msra.mxu0 0.0
    %386 = vmatprep.mubr.f32.mxu0 0.0
    %387 = vmatmul.mubr.f32.gmra.mrb[0].mxu0 %v320
    %v388 = vpop.f32.mrb[0].mxu0
    %v389 = vadd.f32 %v316, %v388
    %v390 = vpop.f32.mrb[0].mxu0
    %v391 = vadd.f32 %v317, %v390
    %392 = vdwg.mxu0
    %v393 = vxor.u32 %v389, 2147483648
    %v394 = vxor.u32 %v391, 2147483648
    %v395 = vmul.f32 %v393, 1.442695
    %v396 = vpow.pop %v395
    %v397 = vmul.f32 %v394, 1.442695
    %v398 = vpow.pop %v397
    %v399 = vadd.f32 %v396, 1.0
    %v400 = vadd.f32 %v398, 1.0
    %v401 = vrcp.pop %v399
    %v402 = vmul.f32 1.0, %v401
    %v403 = vrcp.pop %v400
    %v404 = vmul.f32 1.0, %v403
    %v405 = vmul.f32 %v404, 2.0
    %v406 = vsub.f32 %v405, 1.0
    %v407 = vmul.f32 %v402, %v303
    %v408 = vmul.f32 %v402, %v406
    %410 = vrot.lane.b32.xlu0 %v408, 64
    %v411 = vpop.permute.xlu0 %410
    %v413 = vadd.f32 %v407, %v411
    %v414 = vtanh.pop %v413
    %v415 = vmul.f32 %v404, %v414
    %417 = vrot.lane.b32.xlu0 %v415, 64
    %v418 = vpop.permute.xlu0 %417
    %s420 = scalar_lea.vmem [#allocation3], 2
    %421 = vst.msk [vmem:[%s420] sm:$0x3] %vm310, %v418
    %v422 = vld [vmem:[#allocation2] sm:$0x30]
    %v423 = vld [vmem:[#allocation2 + $0x8] sm:$0x30]
    %v426 = vrot.slane %v422, 4
    %v427 = vrot.slane %v423, 4
    %v430 = vsel %vm204, %v418, 0
    %432 = vmatprep.subr.mxu0 %v185
    %433 = vmatpush1.msra.mxu0 %v184
    %434 = vmatprep.subr.mxu0 %v187
    %435 = vmatpush1.msra.mxu0 %v186
    %436 = vmatprep.subr.mxu0 %v189
    %437 = vmatpush1.msra.mxu0 %v188
    %438 = vmatprep.subr.mxu0 %v191
    %439 = vmatpush1.msra.mxu0 %v190
    %440 = vmatprep.subr.mxu0 %v193
    %441 = vmatpush1.msra.mxu0 %v192
    %442 = vmatprep.subr.mxu0 %v195
    %443 = vmatpush1.msra.mxu0 %v194
    %444 = vmatprep.subr.mxu0 %v197
    %445 = vmatpush1.msra.mxu0 %v196
    %446 = vmatprep.subr.mxu0 %v199
    %447 = vmatpush1.msra.mxu0 %v198
    %448 = vmatprep.subr.mxu0 0.0
    %449 = vmatpush1.msra.mxu0 0.0
    %450 = vmatprep.subr.mxu0 0.0
    %451 = vmatpush1.msra.mxu0 0.0
    %452 = vmatprep.subr.mxu0 0.0
    %453 = vmatpush1.msra.mxu0 0.0
    %454 = vmatprep.subr.mxu0 0.0
    %455 = vmatpush1.msra.mxu0 0.0
    %456 = vmatprep.subr.mxu0 0.0
    %457 = vmatpush1.msra.mxu0 0.0
    %458 = vmatprep.subr.mxu0 0.0
    %459 = vmatpush1.msra.mxu0 0.0
    %460 = vmatprep.subr.mxu0 0.0
    %461 = vmatpush1.msra.mxu0 0.0
    %462 = vmatprep.subr.mxu0 0.0
    %463 = vmatpush1.msra.mxu0 0.0
    %464 = vmatprep.subr.mxu0 0.0
    %465 = vmatpush1.msra.mxu0 0.0
    %466 = vmatprep.subr.mxu0 0.0
    %467 = vmatpush1.msra.mxu0 0.0
    %468 = vmatprep.subr.mxu0 0.0
    %469 = vmatpush1.msra.mxu0 0.0
    %470 = vmatprep.subr.mxu0 0.0
    %471 = vmatpush1.msra.mxu0 0.0
    %472 = vmatprep.subr.mxu0 0.0
    %473 = vmatpush1.msra.mxu0 0.0
    %474 = vmatprep.subr.mxu0 0.0
    %475 = vmatpush1.msra.mxu0 0.0
    %476 = vmatprep.subr.mxu0 0.0
    %477 = vmatpush1.msra.mxu0 0.0
    %478 = vmatprep.subr.mxu0 0.0
    %479 = vmatpush1.msra.mxu0 0.0
    %480 = vmatprep.subr.mxu0 0.0
    %481 = vmatpush1.msra.mxu0 0.0
    %482 = vmatprep.subr.mxu0 0.0
    %483 = vmatpush1.msra.mxu0 0.0
    %484 = vmatprep.subr.mxu0 0.0
    %485 = vmatpush1.msra.mxu0 0.0
    %486 = vmatprep.subr.mxu0 0.0
    %487 = vmatpush1.msra.mxu0 0.0
    %488 = vmatprep.subr.mxu0 0.0
    %489 = vmatpush1.msra.mxu0 0.0
    %490 = vmatprep.subr.mxu0 0.0
    %491 = vmatpush1.msra.mxu0 0.0
    %492 = vmatprep.subr.mxu0 0.0
    %493 = vmatpush1.msra.mxu0 0.0
    %494 = vmatprep.subr.mxu0 0.0
    %495 = vmatpush1.msra.mxu0 0.0
    %496 = vmatprep.mubr.f32.mxu0 0.0
    %497 = vmatmul.mubr.f32.gmra.mrb[0].mxu0 %v430
    %v498 = vpop.f32.mrb[0].mxu0
    %v499 = vadd.f32 %v426, %v498
    %v500 = vpop.f32.mrb[0].mxu0
    %v501 = vadd.f32 %v427, %v500
    %502 = vdwg.mxu0
    %v503 = vxor.u32 %v499, 2147483648
    %v504 = vxor.u32 %v501, 2147483648
    %v505 = vmul.f32 %v503, 1.442695
    %v506 = vpow.pop %v505
    %v507 = vmul.f32 %v504, 1.442695
    %v508 = vpow.pop %v507
    %v509 = vadd.f32 %v506, 1.0
    %v510 = vadd.f32 %v508, 1.0
    %v511 = vrcp.pop %v509
    %v512 = vmul.f32 1.0, %v511
    %v513 = vrcp.pop %v510
    %v514 = vmul.f32 1.0, %v513
    %v515 = vmul.f32 %v514, 2.0
    %v516 = vsub.f32 %v515, 1.0
    %v517 = vmul.f32 %v512, %v413
    %v518 = vmul.f32 %v512, %v516
    %520 = vrot.lane.b32.xlu0 %v518, 64
    %v521 = vpop.permute.xlu0 %520
    %v523 = vadd.f32 %v517, %v521
    %v524 = vtanh.pop %v523
    %v525 = vmul.f32 %v514, %v524
    %527 = vrot.lane.b32.xlu0 %v525, 64
    %v528 = vpop.permute.xlu0 %527
    %s530 = scalar_lea.vmem [#allocation3], 4
    %531 = vst.msk [vmem:[%s530] sm:$0x3] %vm310, %v528
    %v532 = vld [vmem:[#allocation2] sm:$0xc0]
    %v533 = vld [vmem:[#allocation2 + $0x8] sm:$0xc0]
    %v536 = vrot.slane %v532, 6
    %v537 = vrot.slane %v533, 6
    %v540 = vsel %vm204, %v528, 0
    %542 = vmatprep.subr.mxu0 %v185
    %543 = vmatpush1.msra.mxu0 %v184
    %544 = vmatprep.subr.mxu0 %v187
    %545 = vmatpush1.msra.mxu0 %v186
    %546 = vmatprep.subr.mxu0 %v189
    %547 = vmatpush1.msra.mxu0 %v188
    %548 = vmatprep.subr.mxu0 %v191
    %549 = vmatpush1.msra.mxu0 %v190
    %550 = vmatprep.subr.mxu0 %v193
    %551 = vmatpush1.msra.mxu0 %v192
    %552 = vmatprep.subr.mxu0 %v195
    %553 = vmatpush1.msra.mxu0 %v194
    %554 = vmatprep.subr.mxu0 %v197
    %555 = vmatpush1.msra.mxu0 %v196
    %556 = vmatprep.subr.mxu0 %v199
    %557 = vmatpush1.msra.mxu0 %v198
    %558 = vmatprep.subr.mxu0 0.0
    %559 = vmatpush1.msra.mxu0 0.0
    %560 = vmatprep.subr.mxu0 0.0
    %561 = vmatpush1.msra.mxu0 0.0
    %562 = vmatprep.subr.mxu0 0.0
    %563 = vmatpush1.msra.mxu0 0.0
    %564 = vmatprep.subr.mxu0 0.0
    %565 = vmatpush1.msra.mxu0 0.0
    %566 = vmatprep.subr.mxu0 0.0
    %567 = vmatpush1.msra.mxu0 0.0
    %568 = vmatprep.subr.mxu0 0.0
    %569 = vmatpush1.msra.mxu0 0.0
    %570 = vmatprep.subr.mxu0 0.0
    %571 = vmatpush1.msra.mxu0 0.0
    %572 = vmatprep.subr.mxu0 0.0
    %573 = vmatpush1.msra.mxu0 0.0
    %574 = vmatprep.subr.mxu0 0.0
    %575 = vmatpush1.msra.mxu0 0.0
    %576 = vmatprep.subr.mxu0 0.0
    %577 = vmatpush1.msra.mxu0 0.0
    %578 = vmatprep.subr.mxu0 0.0
    %579 = vmatpush1.msra.mxu0 0.0
    %580 = vmatprep.subr.mxu0 0.0
    %581 = vmatpush1.msra.mxu0 0.0
    %582 = vmatprep.subr.mxu0 0.0
    %583 = vmatpush1.msra.mxu0 0.0
    %584 = vmatprep.subr.mxu0 0.0
    %585 = vmatpush1.msra.mxu0 0.0
    %586 = vmatprep.subr.mxu0 0.0
    %587 = vmatpush1.msra.mxu0 0.0
    %588 = vmatprep.subr.mxu0 0.0
    %589 = vmatpush1.msra.mxu0 0.0
    %590 = vmatprep.subr.mxu0 0.0
    %591 = vmatpush1.msra.mxu0 0.0
    %592 = vmatprep.subr.mxu0 0.0
    %593 = vmatpush1.msra.mxu0 0.0
    %594 = vmatprep.subr.mxu0 0.0
    %595 = vmatpush1.msra.mxu0 0.0
    %596 = vmatprep.subr.mxu0 0.0
    %597 = vmatpush1.msra.mxu0 0.0
    %598 = vmatprep.subr.mxu0 0.0
    %599 = vmatpush1.msra.mxu0 0.0
    %600 = vmatprep.subr.mxu0 0.0
    %601 = vmatpush1.msra.mxu0 0.0
    %602 = vmatprep.subr.mxu0 0.0
    %603 = vmatpush1.msra.mxu0 0.0
    %604 = vmatprep.subr.mxu0 0.0
    %605 = vmatpush1.msra.mxu0 0.0
    %606 = vmatprep.mubr.f32.mxu0 0.0
    %607 = vmatmul.mubr.f32.gmra.mrb[0].mxu0 %v540
    %v608 = vpop.f32.mrb[0].mxu0
    %v609 = vadd.f32 %v536, %v608
    %v610 = vpop.f32.mrb[0].mxu0
    %v611 = vadd.f32 %v537, %v610
    %612 = vdwg.mxu0
    %v613 = vxor.u32 %v609, 2147483648
    %v614 = vxor.u32 %v611, 2147483648
    %v615 = vmul.f32 %v613, 1.442695
    %v616 = vpow.pop %v615
    %v617 = vmul.f32 %v614, 1.442695
    %v618 = vpow.pop %v617
    %v619 = vadd.f32 %v616, 1.0
    %v620 = vadd.f32 %v618, 1.0
    %v621 = vrcp.pop %v619
    %v622 = vmul.f32 1.0, %v621
    %v623 = vrcp.pop %v620
    %v624 = vmul.f32 1.0, %v623
    %v625 = vmul.f32 %v624, 2.0
    %v626 = vsub.f32 %v625, 1.0
    %v627 = vmul.f32 %v622, %v523
    %v628 = vmul.f32 %v622, %v626
    %630 = vrot.lane.b32.xlu0 %v628, 64
    %v631 = vpop.permute.xlu0 %630
    %v633 = vadd.f32 %v627, %v631
    %v634 = vtanh.pop %v633
    %v635 = vmul.f32 %v624, %v634
    %637 = vrot.lane.b32.xlu0 %v635, 64
    %v638 = vpop.permute.xlu0 %637
    %s640 = scalar_lea.vmem [#allocation3], 6
    %641 = vst.msk [vmem:[%s640] sm:$0x3] %vm310, %v638
    %v642 = vld [vmem:[#allocation2 + $0x10] sm:$0x3]
    %v643 = vld [vmem:[#allocation2 + $0x18] sm:$0x3]
    %v644 = vsel %vm204, %v638, 0
    %646 = vmatprep.subr.mxu0 %v185
    %647 = vmatpush1.msra.mxu0 %v184
    %648 = vmatprep.subr.mxu0 %v187
    %649 = vmatpush1.msra.mxu0 %v186
    %650 = vmatprep.subr.mxu0 %v189
    %651 = vmatpush1.msra.mxu0 %v188
    %652 = vmatprep.subr.mxu0 %v191
    %653 = vmatpush1.msra.mxu0 %v190
    %654 = vmatprep.subr.mxu0 %v193
    %655 = vmatpush1.msra.mxu0 %v192
    %656 = vmatprep.subr.mxu0 %v195
    %657 = vmatpush1.msra.mxu0 %v194
    %658 = vmatprep.subr.mxu0 %v197
    %659 = vmatpush1.msra.mxu0 %v196
    %660 = vmatprep.subr.mxu0 %v199
    %661 = vmatpush1.msra.mxu0 %v198
    %662 = vmatprep.subr.mxu0 0.0
    %663 = vmatpush1.msra.mxu0 0.0
    %664 = vmatprep.subr.mxu0 0.0
    %665 = vmatpush1.msra.mxu0 0.0
    %666 = vmatprep.subr.mxu0 0.0
    %667 = vmatpush1.msra.mxu0 0.0
    %668 = vmatprep.subr.mxu0 0.0
    %669 = vmatpush1.msra.mxu0 0.0
    %670 = vmatprep.subr.mxu0 0.0
    %671 = vmatpush1.msra.mxu0 0.0
    %672 = vmatprep.subr.mxu0 0.0
    %673 = vmatpush1.msra.mxu0 0.0
    %674 = vmatprep.subr.mxu0 0.0
    %675 = vmatpush1.msra.mxu0 0.0
    %676 = vmatprep.subr.mxu0 0.0
    %677 = vmatpush1.msra.mxu0 0.0
    %678 = vmatprep.subr.mxu0 0.0
    %679 = vmatpush1.msra.mxu0 0.0
    %680 = vmatprep.subr.mxu0 0.0
    %681 = vmatpush1.msra.mxu0 0.0
    %682 = vmatprep.subr.mxu0 0.0
    %683 = vmatpush1.msra.mxu0 0.0
    %684 = vmatprep.subr.mxu0 0.0
    %685 = vmatpush1.msra.mxu0 0.0
    %686 = vmatprep.subr.mxu0 0.0
    %687 = vmatpush1.msra.mxu0 0.0
    %688 = vmatprep.subr.mxu0 0.0
    %689 = vmatpush1.msra.mxu0 0.0
    %690 = vmatprep.subr.mxu0 0.0
    %691 = vmatpush1.msra.mxu0 0.0
    %692 = vmatprep.subr.mxu0 0.0
    %693 = vmatpush1.msra.mxu0 0.0
    %694 = vmatprep.subr.mxu0 0.0
    %695 = vmatpush1.msra.mxu0 0.0
    %696 = vmatprep.subr.mxu0 0.0
    %697 = vmatpush1.msra.mxu0 0.0
    %698 = vmatprep.subr.mxu0 0.0
    %699 = vmatpush1.msra.mxu0 0.0
    %700 = vmatprep.subr.mxu0 0.0
    %701 = vmatpush1.msra.mxu0 0.0
    %702 = vmatprep.subr.mxu0 0.0
    %703 = vmatpush1.msra.mxu0 0.0
    %704 = vmatprep.subr.mxu0 0.0
    %705 = vmatpush1.msra.mxu0 0.0
    %706 = vmatprep.subr.mxu0 0.0
    %707 = vmatpush1.msra.mxu0 0.0
    %708 = vmatprep.subr.mxu0 0.0
    %709 = vmatpush1.msra.mxu0 0.0
    %710 = vmatprep.mubr.f32.mxu0 0.0
    %711 = vmatmul.mubr.f32.gmra.mrb[0].mxu0 %v644
    %v712 = vpop.f32.mrb[0].mxu0
    %v713 = vadd.f32 %v642, %v712
    %v714 = vpop.f32.mrb[0].mxu0
    %v715 = vadd.f32 %v643, %v714
    %716 = vdwg.mxu0
    %v717 = vxor.u32 %v713, 2147483648
    %v718 = vxor.u32 %v715, 2147483648
    %v719 = vmul.f32 %v717, 1.442695
    %v720 = vpow.pop %v719
    %v721 = vmul.f32 %v718, 1.442695
    %v722 = vpow.pop %v721
    %v723 = vadd.f32 %v720, 1.0
    %v724 = vadd.f32 %v722, 1.0
    %v725 = vrcp.pop %v723
    %v726 = vmul.f32 1.0, %v725
    %v727 = vrcp.pop %v724
    %v728 = vmul.f32 1.0, %v727
    %v729 = vmul.f32 %v728, 2.0
    %v730 = vsub.f32 %v729, 1.0
    %v731 = vmul.f32 %v726, %v633
    %v732 = vmul.f32 %v726, %v730
    %734 = vrot.lane.b32.xlu0 %v732, 64
    %v735 = vpop.permute.xlu0 %734
    %v737 = vadd.f32 %v731, %v735
    %v738 = vtanh.pop %v737
    %v739 = vmul.f32 %v728, %v738
    %741 = vrot.lane.b32.xlu0 %v739, 64
    %v742 = vpop.permute.xlu0 %741
    %s744 = scalar_lea.vmem [#allocation3], 8
    %745 = vst.msk [vmem:[%s744] sm:$0x3] %vm310, %v742
    %v746 = vld [vmem:[#allocation2 + $0x10] sm:$0xc]
    %v747 = vld [vmem:[#allocation2 + $0x18] sm:$0xc]
    %v750 = vrot.slane %v746, 2
    %v751 = vrot.slane %v747, 2
    %v754 = vsel %vm204, %v742, 0
    %756 = vmatprep.subr.mxu0 %v185
    %757 = vmatpush1.msra.mxu0 %v184
    %758 = vmatprep.subr.mxu0 %v187
    %759 = vmatpush1.msra.mxu0 %v186
    %760 = vmatprep.subr.mxu0 %v189
    %761 = vmatpush1.msra.mxu0 %v188
    %762 = vmatprep.subr.mxu0 %v191
    %763 = vmatpush1.msra.mxu0 %v190
    %764 = vmatprep.subr.mxu0 %v193
    %765 = vmatpush1.msra.mxu0 %v192
    %766 = vmatprep.subr.mxu0 %v195
    %767 = vmatpush1.msra.mxu0 %v194
    %768 = vmatprep.subr.mxu0 %v197
    %769 = vmatpush1.msra.mxu0 %v196
    %770 = vmatprep.subr.mxu0 %v199
    %771 = vmatpush1.msra.mxu0 %v198
    %772 = vmatprep.subr.mxu0 0.0
    %773 = vmatpush1.msra.mxu0 0.0
    %774 = vmatprep.subr.mxu0 0.0
    %775 = vmatpush1.msra.mxu0 0.0
    %776 = vmatprep.subr.mxu0 0.0
    %777 = vmatpush1.msra.mxu0 0.0
    %778 = vmatprep.subr.mxu0 0.0
    %779 = vmatpush1.msra.mxu0 0.0
    %780 = vmatprep.subr.mxu0 0.0
    %781 = vmatpush1.msra.mxu0 0.0
    %782 = vmatprep.subr.mxu0 0.0
    %783 = vmatpush1.msra.mxu0 0.0
    %784 = vmatprep.subr.mxu0 0.0
    %785 = vmatpush1.msra.mxu0 0.0
    %786 = vmatprep.subr.mxu0 0.0
    %787 = vmatpush1.msra.mxu0 0.0
    %788 = vmatprep.subr.mxu0 0.0
    %789 = vmatpush1.msra.mxu0 0.0
    %790 = vmatprep.subr.mxu0 0.0
    %791 = vmatpush1.msra.mxu0 0.0
    %792 = vmatprep.subr.mxu0 0.0
    %793 = vmatpush1.msra.mxu0 0.0
    %794 = vmatprep.subr.mxu0 0.0
    %795 = vmatpush1.msra.mxu0 0.0
    %796 = vmatprep.subr.mxu0 0.0
    %797 = vmatpush1.msra.mxu0 0.0
    %798 = vmatprep.subr.mxu0 0.0
    %799 = vmatpush1.msra.mxu0 0.0
    %800 = vmatprep.subr.mxu0 0.0
    %801 = vmatpush1.msra.mxu0 0.0
    %802 = vmatprep.subr.mxu0 0.0
    %803 = vmatpush1.msra.mxu0 0.0
    %804 = vmatprep.subr.mxu0 0.0
    %805 = vmatpush1.msra.mxu0 0.0
    %806 = vmatprep.subr.mxu0 0.0
    %807 = vmatpush1.msra.mxu0 0.0
    %808 = vmatprep.subr.mxu0 0.0
    %809 = vmatpush1.msra.mxu0 0.0
    %810 = vmatprep.subr.mxu0 0.0
    %811 = vmatpush1.msra.mxu0 0.0
    %812 = vmatprep.subr.mxu0 0.0
    %813 = vmatpush1.msra.mxu0 0.0
    %814 = vmatprep.subr.mxu0 0.0
    %815 = vmatpush1.msra.mxu0 0.0
    %816 = vmatprep.subr.mxu0 0.0
    %817 = vmatpush1.msra.mxu0 0.0
    %818 = vmatprep.subr.mxu0 0.0
    %819 = vmatpush1.msra.mxu0 0.0
    %820 = vmatprep.mubr.f32.mxu0 0.0
    %821 = vmatmul.mubr.f32.gmra.mrb[0].mxu0 %v754
    %v822 = vpop.f32.mrb[0].mxu0
    %v823 = vadd.f32 %v750, %v822
    %v824 = vpop.f32.mrb[0].mxu0
    %v825 = vadd.f32 %v751, %v824
    %826 = vdwg.mxu0
    %v827 = vxor.u32 %v823, 2147483648
    %v828 = vxor.u32 %v825, 2147483648
    %v829 = vmul.f32 %v827, 1.442695
    %v830 = vpow.pop %v829
    %v831 = vmul.f32 %v828, 1.442695
    %v832 = vpow.pop %v831
    %v833 = vadd.f32 %v830, 1.0
    %v834 = vadd.f32 %v832, 1.0
    %v835 = vrcp.pop %v833
    %v836 = vmul.f32 1.0, %v835
    %v837 = vrcp.pop %v834
    %v838 = vmul.f32 1.0, %v837
    %v839 = vmul.f32 %v838, 2.0
    %v840 = vsub.f32 %v839, 1.0
    %v841 = vmul.f32 %v836, %v737
    %v842 = vmul.f32 %v836, %v840
    %844 = vrot.lane.b32.xlu0 %v842, 64
    %v845 = vpop.permute.xlu0 %844
    %v847 = vadd.f32 %v841, %v845
    %v848 = vtanh.pop %v847
    %v849 = vmul.f32 %v838, %v848
    %851 = vrot.lane.b32.xlu0 %v849, 64
    %v852 = vpop.permute.xlu0 %851
    %s854 = scalar_lea.vmem [#allocation3], 10
    %855 = vst.msk [vmem:[%s854] sm:$0x3] %vm310, %v852
    %v856 = vld [vmem:[#allocation2 + $0x10] sm:$0x30]
    %v857 = vld [vmem:[#allocation2 + $0x18] sm:$0x30]
    %v860 = vrot.slane %v856, 4
    %v861 = vrot.slane %v857, 4
    %v864 = vsel %vm204, %v852, 0
    %866 = vmatprep.subr.mxu0 %v185
    %867 = vmatpush1.msra.mxu0 %v184
    %868 = vmatprep.subr.mxu0 %v187
    %869 = vmatpush1.msra.mxu0 %v186
    %870 = vmatprep.subr.mxu0 %v189
    %871 = vmatpush1.msra.mxu0 %v188
    %872 = vmatprep.subr.mxu0 %v191
    %873 = vmatpush1.msra.mxu0 %v190
    %874 = vmatprep.subr.mxu0 %v193
    %875 = vmatpush1.msra.mxu0 %v192
    %876 = vmatprep.subr.mxu0 %v195
    %877 = vmatpush1.msra.mxu0 %v194
    %878 = vmatprep.subr.mxu0 %v197
    %879 = vmatpush1.msra.mxu0 %v196
    %880 = vmatprep.subr.mxu0 %v199
    %881 = vmatpush1.msra.mxu0 %v198
    %882 = vmatprep.subr.mxu0 0.0
    %883 = vmatpush1.msra.mxu0 0.0
    %884 = vmatprep.subr.mxu0 0.0
    %885 = vmatpush1.msra.mxu0 0.0
    %886 = vmatprep.subr.mxu0 0.0
    %887 = vmatpush1.msra.mxu0 0.0
    %888 = vmatprep.subr.mxu0 0.0
    %889 = vmatpush1.msra.mxu0 0.0
    %890 = vmatprep.subr.mxu0 0.0
    %891 = vmatpush1.msra.mxu0 0.0
    %892 = vmatprep.subr.mxu0 0.0
    %893 = vmatpush1.msra.mxu0 0.0
    %894 = vmatprep.subr.mxu0 0.0
    %895 = vmatpush1.msra.mxu0 0.0
    %896 = vmatprep.subr.mxu0 0.0
    %897 = vmatpush1.msra.mxu0 0.0
    %898 = vmatprep.subr.mxu0 0.0
    %899 = vmatpush1.msra.mxu0 0.0
    %900 = vmatprep.subr.mxu0 0.0
    %901 = vmatpush1.msra.mxu0 0.0
    %902 = vmatprep.subr.mxu0 0.0
    %903 = vmatpush1.msra.mxu0 0.0
    %904 = vmatprep.subr.mxu0 0.0
    %905 = vmatpush1.msra.mxu0 0.0
    %906 = vmatprep.subr.mxu0 0.0
    %907 = vmatpush1.msra.mxu0 0.0
    %908 = vmatprep.subr.mxu0 0.0
    %909 = vmatpush1.msra.mxu0 0.0
    %910 = vmatprep.subr.mxu0 0.0
    %911 = vmatpush1.msra.mxu0 0.0
    %912 = vmatprep.subr.mxu0 0.0
    %913 = vmatpush1.msra.mxu0 0.0
    %914 = vmatprep.subr.mxu0 0.0
    %915 = vmatpush1.msra.mxu0 0.0
    %916 = vmatprep.subr.mxu0 0.0
    %917 = vmatpush1.msra.mxu0 0.0
    %918 = vmatprep.subr.mxu0 0.0
    %919 = vmatpush1.msra.mxu0 0.0
    %920 = vmatprep.subr.mxu0 0.0
    %921 = vmatpush1.msra.mxu0 0.0
    %922 = vmatprep.subr.mxu0 0.0
    %923 = vmatpush1.msra.mxu0 0.0
    %924 = vmatprep.subr.mxu0 0.0
    %925 = vmatpush1.msra.mxu0 0.0
    %926 = vmatprep.subr.mxu0 0.0
    %927 = vmatpush1.msra.mxu0 0.0
    %928 = vmatprep.subr.mxu0 0.0
    %929 = vmatpush1.msra.mxu0 0.0
    %930 = vmatprep.mubr.f32.mxu0 0.0
    %931 = vmatmul.mubr.f32.gmra.mrb[0].mxu0 %v864
    %v932 = vpop.f32.mrb[0].mxu0
    %v933 = vadd.f32 %v860, %v932
    %v934 = vpop.f32.mrb[0].mxu0
    %v935 = vadd.f32 %v861, %v934
    %936 = vdwg.mxu0
    %v937 = vxor.u32 %v933, 2147483648
    %v938 = vxor.u32 %v935, 2147483648
    %v939 = vmul.f32 %v937, 1.442695
    %v940 = vpow.pop %v939
    %v941 = vmul.f32 %v938, 1.442695
    %v942 = vpow.pop %v941
    %v943 = vadd.f32 %v940, 1.0
    %v944 = vadd.f32 %v942, 1.0
    %v945 = vrcp.pop %v943
    %v946 = vmul.f32 1.0, %v945
    %v947 = vrcp.pop %v944
    %v948 = vmul.f32 1.0, %v947
    %v949 = vmul.f32 %v948, 2.0
    %v950 = vsub.f32 %v949, 1.0
    %v951 = vmul.f32 %v946, %v847
    %v952 = vmul.f32 %v946, %v950
    %954 = vrot.lane.b32.xlu0 %v952, 64
    %v955 = vpop.permute.xlu0 %954
    %v957 = vadd.f32 %v951, %v955
    %v958 = vtanh.pop %v957
    %v959 = vmul.f32 %v948, %v958
    %961 = vrot.lane.b32.xlu0 %v959, 64
    %v962 = vpop.permute.xlu0 %961
    %s964 = scalar_lea.vmem [#allocation3], 12
    %965 = vst.msk [vmem:[%s964] sm:$0x3] %vm310, %v962
    %v966 = vld [vmem:[#allocation2 + $0x10] sm:$0xc0]
    %v967 = vld [vmem:[#allocation2 + $0x18] sm:$0xc0]
    %v970 = vrot.slane %v966, 6
    %v971 = vrot.slane %v967, 6
    %v974 = vsel %vm204, %v962, 0
    %976 = vmatprep.subr.mxu0 %v185
    %977 = vmatpush1.msra.mxu0 %v184
    %978 = vmatprep.subr.mxu0 %v187
    %979 = vmatpush1.msra.mxu0 %v186
    %980 = vmatprep.subr.mxu0 %v189
    %981 = vmatpush1.msra.mxu0 %v188
    %982 = vmatprep.subr.mxu0 %v191
    %983 = vmatpush1.msra.mxu0 %v190
    %984 = vmatprep.subr.mxu0 %v193
    %985 = vmatpush1.msra.mxu0 %v192
    %986 = vmatprep.subr.mxu0 %v195
    %987 = vmatpush1.msra.mxu0 %v194
    %988 = vmatprep.subr.mxu0 %v197
    %989 = vmatpush1.msra.mxu0 %v196
    %990 = vmatprep.subr.mxu0 %v199
    %991 = vmatpush1.msra.mxu0 %v198
    %992 = vmatprep.subr.mxu0 0.0
    %993 = vmatpush1.msra.mxu0 0.0
    %994 = vmatprep.subr.mxu0 0.0
    %995 = vmatpush1.msra.mxu0 0.0
    %996 = vmatprep.subr.mxu0 0.0
    %997 = vmatpush1.msra.mxu0 0.0
    %998 = vmatprep.subr.mxu0 0.0
    %999 = vmatpush1.msra.mxu0 0.0
    %1000 = vmatprep.subr.mxu0 0.0
    %1001 = vmatpush1.msra.mxu0 0.0
    %1002 = vmatprep.subr.mxu0 0.0
    %1003 = vmatpush1.msra.mxu0 0.0
    %1004 = vmatprep.subr.mxu0 0.0
    %1005 = vmatpush1.msra.mxu0 0.0
    %1006 = vmatprep.subr.mxu0 0.0
    %1007 = vmatpush1.msra.mxu0 0.0
    %1008 = vmatprep.subr.mxu0 0.0
    %1009 = vmatpush1.msra.mxu0 0.0
    %1010 = vmatprep.subr.mxu0 0.0
    %1011 = vmatpush1.msra.mxu0 0.0
    %1012 = vmatprep.subr.mxu0 0.0
    %1013 = vmatpush1.msra.mxu0 0.0
    %1014 = vmatprep.subr.mxu0 0.0
    %1015 = vmatpush1.msra.mxu0 0.0
    %1016 = vmatprep.subr.mxu0 0.0
    %1017 = vmatpush1.msra.mxu0 0.0
    %1018 = vmatprep.subr.mxu0 0.0
    %1019 = vmatpush1.msra.mxu0 0.0
    %1020 = vmatprep.subr.mxu0 0.0
    %1021 = vmatpush1.msra.mxu0 0.0
    %1022 = vmatprep.subr.mxu0 0.0
    %1023 = vmatpush1.msra.mxu0 0.0
    %1024 = vmatprep.subr.mxu0 0.0
    %1025 = vmatpush1.msra.mxu0 0.0
    %1026 = vmatprep.subr.mxu0 0.0
    %1027 = vmatpush1.msra.mxu0 0.0
    %1028 = vmatprep.subr.mxu0 0.0
    %1029 = vmatpush1.msra.mxu0 0.0
    %1030 = vmatprep.subr.mxu0 0.0
    %1031 = vmatpush1.msra.mxu0 0.0
    %1032 = vmatprep.subr.mxu0 0.0
    %1033 = vmatpush1.msra.mxu0 0.0
    %1034 = vmatprep.subr.mxu0 0.0
    %1035 = vmatpush1.msra.mxu0 0.0
    %1036 = vmatprep.subr.mxu0 0.0
    %1037 = vmatpush1.msra.mxu0 0.0
    %1038 = vmatprep.subr.mxu0 0.0
    %1039 = vmatpush1.msra.mxu0 0.0
    %1040 = vmatprep.mubr.f32.mxu0 0.0
    %1041 = vmatmul.mubr.f32.gmra.mrb[0].mxu0 %v974
    %v1042 = vpop.f32.mrb[0].mxu0
    %v1043 = vadd.f32 %v970, %v1042
    %v1044 = vpop.f32.mrb[0].mxu0
    %v1045 = vadd.f32 %v971, %v1044
    %1046 = vdwg.mxu0
    %v1047 = vxor.u32 %v1043, 2147483648
    %v1048 = vxor.u32 %v1045, 2147483648
    %v1049 = vmul.f32 %v1047, 1.442695
    %v1050 = vpow.pop %v1049
    %v1051 = vmul.f32 %v1048, 1.442695
    %v1052 = vpow.pop %v1051
    %v1053 = vadd.f32 %v1050, 1.0
    %v1054 = vadd.f32 %v1052, 1.0
    %v1055 = vrcp.pop %v1053
    %v1056 = vmul.f32 1.0, %v1055
    %v1057 = vrcp.pop %v1054
    %v1058 = vmul.f32 1.0, %v1057
    %v1059 = vmul.f32 %v1058, 2.0
    %v1060 = vsub.f32 %v1059, 1.0
    %v1061 = vmul.f32 %v1056, %v957
    %v1062 = vmul.f32 %v1056, %v1060
    %1064 = vrot.lane.b32.xlu0 %v1062, 64
    %v1065 = vpop.permute.xlu0 %1064
    %v1067 = vadd.f32 %v1061, %v1065
    %v1068 = vtanh.pop %v1067
    %v1069 = vmul.f32 %v1058, %v1068
    %1071 = vrot.lane.b32.xlu0 %v1069, 64
    %v1072 = vpop.permute.xlu0 %1071
    %s1074 = scalar_lea.vmem [#allocation3], 14
    %1075 = vst.msk [vmem:[%s1074] sm:$0x3] %vm310, %v1072
    %1076 = vst.msk [vmem:[#allocation11] sm:$0x3] %vm310, %v1072
    %1078 = vrot.lane.b32.xlu0 %v1067, 64
    %v1079 = vpop.permute.xlu0 %1078
    %1081 = vst.msk [vmem:[#allocation13] sm:$0x3] %vm310, %v1079
    %v1082 = vld [vmem:[#allocation3] sm:$0x3]
    %v1083 = vld [vmem:[#allocation3 + $0x2] sm:$0x3]
    %v1084 = vld [vmem:[#allocation3 + $0x4] sm:$0x3]
    %v1085 = vld [vmem:[#allocation3 + $0x6] sm:$0x3]
    %v1086 = vld [vmem:[#allocation3 + $0x8] sm:$0x3]
    %v1087 = vld [vmem:[#allocation3 + $0xa] sm:$0x3]
    %v1088 = vld [vmem:[#allocation3 + $0xc] sm:$0x3]
    %v1089 = vld [vmem:[#allocation3 + $0xe] sm:$0x3]
    %v1090 = vld [vmem:[%s6] sm:$0x1]
    %v1092 = vlaneseq
    %v1093 = vshrl.u32 %v1092, 7
    %v1094 = vsub.s32 0, %v1093
    %v1095 = vrot.slane %v1090, %v1094
    %v1097 = vmul.f32 %v1082, %v1095
    %v1098 = vmul.f32 %v1083, %v1095
    %v1099 = vmul.f32 %v1084, %v1095
    %v1100 = vmul.f32 %v1085, %v1095
    %v1101 = vmul.f32 %v1086, %v1095
    %v1102 = vmul.f32 %v1087, %v1095
    %v1103 = vmul.f32 %v1088, %v1095
    %v1104 = vmul.f32 %v1089, %v1095
    %v1105 = vsel %vm310, %v1097, 0.0
    %1106 = vadd.xlane.f32.xlu0 %v1105
    %v1107 = vpop.xlane.xlu0 %1106
    %v1108 = vsel %vm310, %v1098, 0.0
    %1109 = vadd.xlane.f32.xlu0 %v1108
    %v1110 = vpop.xlane.xlu0 %1109
    %v1111 = vsel %vm310, %v1099, 0.0
    %1112 = vadd.xlane.f32.xlu0 %v1111
    %v1113 = vpop.xlane.xlu0 %1112
    %v1114 = vsel %vm310, %v1100, 0.0
    %1115 = vadd.xlane.f32.xlu0 %v1114
    %v1116 = vpop.xlane.xlu0 %1115
    %v1117 = vsel %vm310, %v1101, 0.0
    %1118 = vadd.xlane.f32.xlu0 %v1117
    %v1119 = vpop.xlane.xlu0 %1118
    %v1120 = vsel %vm310, %v1102, 0.0
    %1121 = vadd.xlane.f32.xlu0 %v1120
    %v1122 = vpop.xlane.xlu0 %1121
    %v1123 = vsel %vm310, %v1103, 0.0
    %1124 = vadd.xlane.f32.xlu0 %v1123
    %v1125 = vpop.xlane.xlu0 %1124
    %v1126 = vsel %vm310, %v1104, 0.0
    %1127 = vadd.xlane.f32.xlu0 %v1126
    %v1128 = vpop.xlane.xlu0 %1127
    %s1129 = sld [smem:[#allocation4]]
    %v1130 = vstv %s1129
    %v1131 = vadd.f32 %v1107, %v1130
    %v1132 = vadd.f32 %v1110, %v1130
    %v1133 = vadd.f32 %v1113, %v1130
    %v1134 = vadd.f32 %v1116, %v1130
    %v1135 = vadd.f32 %v1119, %v1130
    %v1136 = vadd.f32 %v1122, %v1130
    %v1137 = vadd.f32 %v1125, %v1130
    %v1138 = vadd.f32 %v1128, %v1130
    %v1139 = vxor.u32 %v1131, 2147483648
    %v1140 = vxor.u32 %v1132, 2147483648
    %v1141 = vxor.u32 %v1133, 2147483648
    %v1142 = vxor.u32 %v1134, 2147483648
    %v1143 = vxor.u32 %v1135, 2147483648
    %v1144 = vxor.u32 %v1136, 2147483648
    %v1145 = vxor.u32 %v1137, 2147483648
    %v1146 = vxor.u32 %v1138, 2147483648
    %v1147 = vmul.f32 %v1139, 1.442695
    %v1148 = vpow.pop %v1147
    %v1149 = vmul.f32 %v1140, 1.442695
    %v1150 = vpow.pop %v1149
    %v1151 = vmul.f32 %v1141, 1.442695
    %v1152 = vpow.pop %v1151
    %v1153 = vmul.f32 %v1142, 1.442695
    %v1154 = vpow.pop %v1153
    %v1155 = vmul.f32 %v1143, 1.442695
    %v1156 = vpow.pop %v1155
    %v1157 = vmul.f32 %v1144, 1.442695
    %v1158 = vpow.pop %v1157
    %v1159 = vmul.f32 %v1145, 1.442695
    %v1160 = vpow.pop %v1159
    %v1161 = vmul.f32 %v1146, 1.442695
    %v1162 = vpow.pop %v1161
    %v1163 = vadd.f32 %v1148, 1.0
    %v1164 = vadd.f32 %v1150, 1.0
    %v1165 = vadd.f32 %v1152, 1.0
    %v1166 = vadd.f32 %v1154, 1.0
    %v1167 = vadd.f32 %v1156, 1.0
    %v1168 = vadd.f32 %v1158, 1.0
    %v1169 = vadd.f32 %v1160, 1.0
    %v1170 = vadd.f32 %v1162, 1.0
    %v1171 = vrcp.pop %v1163
    %v1172 = vmul.f32 1.0, %v1171
    %v1173 = vrcp.pop %v1164
    %v1174 = vmul.f32 1.0, %v1173
    %v1175 = vrcp.pop %v1165
    %v1176 = vmul.f32 1.0, %v1175
    %v1177 = vrcp.pop %v1166
    %v1178 = vmul.f32 1.0, %v1177
    %v1179 = vrcp.pop %v1167
    %v1180 = vmul.f32 1.0, %v1179
    %v1181 = vrcp.pop %v1168
    %v1182 = vmul.f32 1.0, %v1181
    %v1183 = vrcp.pop %v1169
    %v1184 = vmul.f32 1.0, %v1183
    %v1185 = vrcp.pop %v1170
    %v1186 = vmul.f32 1.0, %v1185
    %v1195 = vlaneseq
    %v1196 = vand.u32 %v1195, 127
    %v1197 = vlaneseq
    %v1198 = vshrl.u32 %v1197, 7
    %v1199 = vsub.s32 %v1196, %v1198
    %v1200 = vrot.slane %v1172, %v1199
    %v1201 = vlaneseq
    %v1202 = vshrl.u32 %v1201, 7
    %v1203 = vsub.s32 %v1196, %v1202
    %v1204 = vrot.slane %v1174, %v1203
    %v1205 = vlaneseq
    %v1206 = vshrl.u32 %v1205, 7
    %v1207 = vsub.s32 %v1196, %v1206
    %v1208 = vrot.slane %v1176, %v1207
    %v1209 = vlaneseq
    %v1210 = vshrl.u32 %v1209, 7
    %v1211 = vsub.s32 %v1196, %v1210
    %v1212 = vrot.slane %v1178, %v1211
    %v1213 = vlaneseq
    %v1214 = vshrl.u32 %v1213, 7
    %v1215 = vsub.s32 %v1196, %v1214
    %v1216 = vrot.slane %v1180, %v1215
    %v1217 = vlaneseq
    %v1218 = vshrl.u32 %v1217, 7
    %v1219 = vsub.s32 %v1196, %v1218
    %v1220 = vrot.slane %v1182, %v1219
    %v1221 = vlaneseq
    %v1222 = vshrl.u32 %v1221, 7
    %v1223 = vsub.s32 %v1196, %v1222
    %v1224 = vrot.slane %v1184, %v1223
    %v1225 = vlaneseq
    %v1226 = vshrl.u32 %v1225, 7
    %v1227 = vsub.s32 %v1196, %v1226
    %v1228 = vrot.slane %v1186, %v1227
    %vm1229 = vcmask 1041409
    %v1230 = vsel %vm1229, %v1204, %v1200
    %vm1231 = vcmask 1042434
    %v1232 = vsel %vm1231, %v1208, %v1230
    %vm1233 = vcmask 1043459
    %v1234 = vsel %vm1233, %v1212, %v1232
    %vm1235 = vcmask 1044484
    %v1236 = vsel %vm1235, %v1216, %v1234
    %vm1237 = vcmask 1045509
    %v1238 = vsel %vm1237, %v1220, %v1236
    %vm1239 = vcmask 1046534
    %v1240 = vsel %vm1239, %v1224, %v1238
    %vm1241 = vcmask 1047559
    %v1242 = vsel %vm1241, %v1228, %v1240
    %1244 = vxpose.xlu0.b32.start [1/16] %v1242, 128
    %1245 = vxpose.xlu0.b32.cont [2/16] 0.0, 128
    %1246 = vxpose.xlu0.b32.cont [3/16] 0.0, 128
    %1247 = vxpose.xlu0.b32.cont [4/16] 0.0, 128
    %1248 = vxpose.xlu0.b32.cont [5/16] 0.0, 128
    %1249 = vxpose.xlu0.b32.cont [6/16] 0.0, 128
    %1250 = vxpose.xlu0.b32.cont [7/16] 0.0, 128
    %1251 = vxpose.xlu0.b32.cont [8/16] 0.0, 128
    %1252 = vxpose.xlu0.b32.cont [9/16] 0.0, 128
    %1253 = vxpose.xlu0.b32.cont [10/16] 0.0, 128
    %1254 = vxpose.xlu0.b32.cont [11/16] 0.0, 128
    %1255 = vxpose.xlu0.b32.cont [12/16] 0.0, 128
    %1256 = vxpose.xlu0.b32.cont [13/16] 0.0, 128
    %1257 = vxpose.xlu0.b32.cont [14/16] 0.0, 128
    %1258 = vxpose.xlu0.b32.cont [15/16] 0.0, 128
    %1259 = vxpose.xlu0.b32.end [16/16] 0.0, 128
    %v1260 = vpop.trf.xlu0
    %v1261 = vpop.trf.xlu0
    %v1262 = vpop.trf.xlu0
    %v1263 = vpop.trf.xlu0
    %v1264 = vpop.trf.xlu0
    %v1265 = vpop.trf.xlu0
    %v1266 = vpop.trf.xlu0
    %v1267 = vpop.trf.xlu0
    %v1268 = vpop.trf.xlu0
    %v1269 = vpop.trf.xlu0
    %v1270 = vpop.trf.xlu0
    %v1271 = vpop.trf.xlu0
    %v1272 = vpop.trf.xlu0
    %v1273 = vpop.trf.xlu0
    %v1274 = vpop.trf.xlu0
    %v1275 = vpop.trf.xlu0
    %vm1276 = vcmask 58368
    %1277 = vst.msk [vmem:[#allocation10] sm:$0x3] %vm1276, %v1260
    // Predicated region
    $region42: #{mylstm_forward.1} parent=1 // pred_check
      _
    $region43: #{mylstm_forward.1} parent=1 // pred_check_branch
      %1279 = sbr.rel (0) target = $region45
    $region44: #{mylstm_forward.1} parent=1 // pred_region
      %s1281 = ssub.s32 32, 32
      %1282 = vsyncadd [#allocation7], %s1281
      %s1284 = sshll.u32 [#allocation10], 4
      %s1285 = int_to_ptr.vmem [resolvable:$true] %s1284
      %1287 = dma.vmem_to_hbm [thread:$0]  %s1285, 32, %s8, [#allocation7]
    $region45: #{mylstm_forward.1} parent=1 // pred_fallthru
      _
    // Predicated region
    $region46: #{mylstm_forward.1} parent=1 // pred_check
      _
    $region47: #{mylstm_forward.1} parent=1 // pred_check_branch
      %1289 = sbr.rel (0) target = $region49
    $region48: #{mylstm_forward.1} parent=1 // pred_region
      %s1291 = ssub.s32 32, 32
      %1292 = vsyncadd [#allocation12], %s1291
      %s1294 = sshll.u32 [#allocation11], 4
      %s1295 = int_to_ptr.vmem [resolvable:$true] %s1294
      %1297 = dma.vmem_to_hbm [thread:$0]  %s1295, 32, %s9, [#allocation12]
    $region49: #{mylstm_forward.1} parent=1 // pred_fallthru
      _
    // Predicated region
    $region50: #{mylstm_forward.1} parent=1 // pred_check
      _
    $region51: #{mylstm_forward.1} parent=1 // pred_check_branch
      %1299 = sbr.rel (0) target = $region53
    $region52: #{mylstm_forward.1} parent=1 // pred_region
      %s1301 = ssub.s32 32, 32
      %1302 = vsyncadd [#allocation12], %s1301
      %s1304 = sshll.u32 [#allocation13], 4
      %s1305 = int_to_ptr.vmem [resolvable:$true] %s1304
      %1307 = dma.vmem_to_hbm [thread:$0]  %s1305, 32, %s10, [#allocation12]
    $region53: #{mylstm_forward.1} parent=1 // pred_fallthru
      _
    // Predicated region
    $region54: #{mylstm_forward.1} parent=1 // pred_check
      _
    $region55: #{mylstm_forward.1} parent=1 // pred_check_branch
      %1309 = sbr.rel (0) target = $region57
    $region56: #{mylstm_forward.1} parent=1 // pred_region
      %1310 = dma.done [#allocation7], 32
    $region57: #{mylstm_forward.1} parent=1 // pred_fallthru
      _
    // Predicated region
    $region58: #{mylstm_forward.1} parent=1 // pred_check
      _
    $region59: #{mylstm_forward.1} parent=1 // pred_check_branch
      %1312 = sbr.rel (0) target = $region61
    $region60: #{mylstm_forward.1} parent=1 // pred_region
      %1313 = dma.done [#allocation12], 32
    $region61: #{mylstm_forward.1} parent=1 // pred_fallthru
      _
    // Predicated region
    $region62: #{mylstm_forward.1} parent=1 // pred_check
      _
    $region63: #{mylstm_forward.1} parent=1 // pred_check_branch
      %1315 = sbr.rel (0) target = $region65
    $region64: #{mylstm_forward.1} parent=1 // pred_region
      %1316 = dma.done [#allocation12], 32
    $region65: #{mylstm_forward.1} parent=1 // pred_fallthru
      _
    %1317 = vsyncpa [#allocation6], 1
    %1318 = vsyncpa [#allocation9], 1
    %1319 = vsyncpa [#allocation7], 1
    %1320 = vsyncpa [#allocation12], 1

</llo_original>
